<compile_context>
chip_gen: v7x
topology: tpu7x:2x2x1
jax: 0.10.0
libtpu: 0.0.40
codegen_flags: <defaults>
</compile_context>

<pallas_src>
import jax
import jax.numpy as jnp
import numpy as np
from jax.experimental import pallas as pl
from jax.experimental.pallas import tpu as pltpu

# ---- module-consistent sizes ------------------------------------------------
# FLAGS.feat_pcl + FLAGS.feat_global_pcl + FLAGS.feat_seman + 3  ->  F_IN
FEAT_PCL, FEAT_GLOBAL_PCL, FEAT_SEMAN = 32, 16, 13
F_IN = FEAT_PCL + FEAT_GLOBAL_PCL + FEAT_SEMAN + 3          # 64
F_PAD = 128                                                 # lane-dense conv1 input
H1, H2 = 1024, 256                                          # fixed by the module
K = 6                                                       # FLAGS.Ts_c
K_PAD = 128                                                 # lane-dense output store
B, N = 2, 16                                                # batch, num points (small test shapes)
BN_EPS = 1e-5


def pose_ts_kernel(x_ref,
                   w1_ref, b1_ref,
                   w2_ref, b2_ref,
                   w3_ref, b3_ref,
                   w4_ref, b4_ref,
                   out_ref, gmax_ref):
    """Grid = (batch, point_tile).
    x_ref:  (1, TILE_N, F_PAD) bf16, channels-last, zero-padded channels.
    wN_ref: (Cin, Cout) BN-folded (w1/w2/w3 bf16, w4 f32); bN_ref: (1, Cout) f32.
    out_ref: (1, 1, K_PAD); gmax_ref: (1, H2) f32 per-batch running max scratch."""
    t = pl.program_id(1)

    @pl.when(t == 0)
    def _():
        # post-ReLU activations are >= 0, so 0 is the identity for the running max.
        gmax_ref[...] = jnp.zeros_like(gmax_ref)

    x_bf = x_ref[0]                                              # (TILE_N, F_PAD) bf16

    # conv1 + bn1 (folded) + relu : bf16 x bf16 -> f32 on the MXU
    h = jnp.dot(x_bf, w1_ref[...],
                preferred_element_type=jnp.float32) + b1_ref[...]
    h = jnp.maximum(h, 0.0)                                      # (TILE_N, 1024) f32

    # conv2 + bn2 (folded) + relu
    h = jnp.dot(h.astype(jnp.bfloat16), w2_ref[...],
                preferred_element_type=jnp.float32) + b2_ref[...]
    h = jnp.maximum(h, 0.0)                                      # (TILE_N, 256) f32

    # torch.max(x, 2, keepdim=True)[0]: running max over the point axis.
    gmax_ref[...] = jnp.maximum(gmax_ref[...],
                                jnp.max(h, axis=0, keepdims=True))

    @pl.when(t == pl.num_programs(1) - 1)
    def _():
        # conv3 + bn3 (folded) + relu
        g = jnp.dot(gmax_ref[...].astype(jnp.bfloat16), w3_ref[...],
                    preferred_element_type=jnp.float32) + b3_ref[...]
        g = jnp.maximum(g, 0.0)                                  # (1, 256)
        # drop1: eval-mode Dropout(0.2) is the identity.
        # conv4 (+ zero-padded extra output lanes, sliced off in the wrapper)
        out = jnp.dot(g, w4_ref[...],
                      preferred_element_type=jnp.float32) + b4_ref[...]
        out_ref[0] = out.astype(out_ref.dtype)                   # (1, K_PAD)


def init_params(key):
    """Torch-equivalent init: conv weight ~ Normal(std=1e-3), bias=0 (normal_init);
    BN gamma=1, beta=0, running_mean=0, running_var=1 (constant_init)."""
    k1, k2, k3, k4 = jax.random.split(key, 4)
    std = 1e-3

    def conv(k, cin, cout):
        # torch Conv1d weight is (cout, cin, 1); keep it as (cout, cin).
        return dict(w=jax.random.normal(k, (cout, cin), jnp.float32) * std,
                    b=jnp.zeros((cout,), jnp.float32))

    def bn(c):
        return dict(gamma=jnp.ones((c,), jnp.float32),
                    beta=jnp.zeros((c,), jnp.float32),
                    mean=jnp.zeros((c,), jnp.float32),
                    var=jnp.ones((c,), jnp.float32))

    return dict(conv1=conv(k1, F_IN, H1), bn1=bn(H1),
                conv2=conv(k2, H1, H2),   bn2=bn(H2),
                conv3=conv(k3, H2, H2),   bn3=bn(H2),
                conv4=conv(k4, H2, K))


def prepare_kernel_params(p):
    """Done ONCE at parameter-construction time (NOT per forward):
    fold eval-mode BN into conv weights/biases, lane-pad w1 rows (64->128) and
    w4/b4 columns (6->128), and store the big weights in bf16 for the MXU."""
    def fold(conv, bn):
        scale = bn['gamma'] * jax.lax.rsqrt(bn['var'] + BN_EPS)      # (Cout,)
        shift = bn['beta'] - bn['mean'] * scale
        w = (conv['w'] * scale[:, None]).T                           # (Cin, Cout), BN folded in
        bias = (conv['b'] * scale + shift)[None, :]                  # (1, Cout)
        return w, bias

    w1, b1 = fold(p['conv1'], p['bn1'])                              # (F_IN, H1)
    w2, b2 = fold(p['conv2'], p['bn2'])                              # (H1, H2)
    w3, b3 = fold(p['conv3'], p['bn3'])                              # (H2, H2)
    w4 = p['conv4']['w'].T                                           # (H2, K), no BN after conv4
    b4 = p['conv4']['b'][None, :]                                    # (1, K)

    # Zero-pad: padded x channels hit zero w1 rows -> no contribution; padded
    # output lanes are never read back.
    w1p = jnp.zeros((F_PAD, H1), jnp.float32).at[:F_IN, :].set(w1)
    w4p = jnp.zeros((H2, K_PAD), jnp.float32).at[:, :K].set(w4)
    b4p = jnp.zeros((1, K_PAD), jnp.float32).at[:, :K].set(b4)

    return dict(w1=w1p.astype(jnp.bfloat16), b1=b1,
                w2=w2.astype(jnp.bfloat16), b2=b2,
                w3=w3.astype(jnp.bfloat16), b3=b3,
                w4=w4p, b4=b4p)


def _pick_tile_n(n):
    """Largest point-tile (multiple of 256 preferred for full MXU passes) that
    divides N; falls back to the full extent for small/odd N."""
    for t in (512, 256, 128, 64, 32, 16, 8):
        if n % t == 0:
            return t
    return n


def pose_ts_forward(x_ncl, kp):
    """x_ncl: (B, F_IN, N) exactly like the torch module (NCL). Returns (xt, xs)."""
    bsz, f_in, npts = x_ncl.shape
    assert f_in == F_IN
    tile_n = _pick_tile_n(npts)
    n_tiles = npts // tile_n

    # NCL -> NLC + channel pad + bf16 cast in the wrapper: one fused XLA pass
    # (fuses into the upstream producer at real sizes), so the kernel never
    # materializes an XLU transpose and layer-1 operands arrive lane-dense.
    x_nlc = jnp.swapaxes(x_ncl, 1, 2)                                # (B, N, F_IN)
    x_nlc = jnp.pad(x_nlc, ((0, 0), (0, 0), (0, F_PAD - f_in)))      # (B, N, F_PAD)
    x_nlc = x_nlc.astype(jnp.bfloat16)

    args = (x_nlc,
            kp['w1'], kp['b1'],
            kp['w2'], kp['b2'],
            kp['w3'], kp['b3'],
            kp['w4'], kp['b4'])

    rows = bsz * npts
    flops = 2 * (rows * F_PAD * H1 + rows * H1 * H2 + bsz * (H2 * H2 + H2 * K_PAD))
    bytes_accessed = sum(int(a.size) * a.dtype.itemsize for a in args) + bsz * K_PAD * 4

    const = lambda b, t: (0, 0)
    out = pl.pallas_call(
        pose_ts_kernel,
        out_shape=jax.ShapeDtypeStruct((bsz, 1, K_PAD), jnp.float32),
        grid=(bsz, n_tiles),
        in_specs=[
            pl.BlockSpec((1, tile_n, F_PAD), lambda b, t: (b, t, 0)),  # x tile
            pl.BlockSpec((F_PAD, H1), const),                          # resident weights
            pl.BlockSpec((1, H1), const),
            pl.BlockSpec((H1, H2), const),
            pl.BlockSpec((1, H2), const),
            pl.BlockSpec((H2, H2), const),
            pl.BlockSpec((1, H2), const),
            pl.BlockSpec((H2, K_PAD), const),
            pl.BlockSpec((1, K_PAD), const),
        ],
        out_specs=pl.BlockSpec((1, 1, K_PAD), lambda b, t: (b, 0, 0)),
        scratch_shapes=[pltpu.VMEM((1, H2), jnp.float32)],             # per-batch running max
        compiler_params=pltpu.CompilerParams(
            dimension_semantics=("parallel", "arbitrary")),
        cost_estimate=pl.CostEstimate(flops=flops, transcendentals=0,
                                      bytes_accessed=bytes_accessed),
    )(*args)

    out = out[:, 0, :]                                                # (B, K_PAD)
    xt = out[:, 0:3]
    xs = out[:, 3:6]
    return xt, xs


def pose_ts_reference(x_ncl, p):
    """Pure-JAX f32 reference of the PyTorch forward (eval mode, unfolded BN)."""
    def conv_bn_relu(x, conv, bn):
        y = jnp.einsum('oc,bcn->bon', conv['w'], x) + conv['b'][None, :, None]
        y = (y - bn['mean'][None, :, None]) * jax.lax.rsqrt(bn['var'] + BN_EPS)[None, :, None]
        y = y * bn['gamma'][None, :, None] + bn['beta'][None, :, None]
        return jnp.maximum(y, 0.0)

    x = x_ncl.astype(jnp.float32)
    x = conv_bn_relu(x, p['conv1'], p['bn1'])
    x = conv_bn_relu(x, p['conv2'], p['bn2'])
    x = jnp.max(x, axis=2, keepdims=True)
    x = conv_bn_relu(x, p['conv3'], p['bn3'])
    # drop1 is identity in eval mode
    x = jnp.einsum('oc,bcn->bon', p['conv4']['w'], x) + p['conv4']['b'][None, :, None]
    x = x[:, :, 0]
    return x[:, 0:3], x[:, 3:6]


if __name__ == "__main__":
    key = jax.random.PRNGKey(0)
    kparam, kx = jax.random.split(key)

    raw_params = init_params(kparam)
    kernel_params = prepare_kernel_params(raw_params)   # one-time fold/pad/cast

    # input matches torch layout: (B, f, N)
    x = jax.random.normal(kx, (B, F_IN, N), jnp.float32)

    xt, xs = jax.block_until_ready(pose_ts_forward(x, kernel_params))
    xt_ref, xs_ref = pose_ts_reference(x, raw_params)

    assert xt.shape == (B, 3) and xs.shape == (B, 3)
    # bf16 weight + activation storage => loosened tolerances vs. the f32
    # torch-semantics reference (outputs are ~1e-7 scale with std=1e-3 init).
    np.testing.assert_allclose(np.asarray(xt), np.asarray(xt_ref), rtol=5e-2, atol=2e-8)
    np.testing.assert_allclose(np.asarray(xs), np.asarray(xs_ref), rtol=5e-2, atol=2e-8)
    print("KERNEL_OK")
</pallas_src>

<mosaic_0001>
module attributes {stable_mosaic.version = 11 : i64} {
  func.func @pose_ts_kernel(%arg0: i32, %arg1: i32, %arg2: memref<1x16x128xbf16, #tpu.memory_space<vmem>>, %arg3: memref<128x1024xbf16, #tpu.memory_space<vmem>>, %arg4: memref<1x1024xf32, #tpu.memory_space<vmem>>, %arg5: memref<1024x256xbf16, #tpu.memory_space<vmem>>, %arg6: memref<1x256xf32, #tpu.memory_space<vmem>>, %arg7: memref<256x256xbf16, #tpu.memory_space<vmem>>, %arg8: memref<1x256xf32, #tpu.memory_space<vmem>>, %arg9: memref<256x128xf32, #tpu.memory_space<vmem>>, %arg10: memref<1x128xf32, #tpu.memory_space<vmem>>, %arg11: memref<1x1x128xf32, #tpu.memory_space<vmem>>, %arg12: memref<1x256xf32, #tpu.memory_space<vmem>>) attributes {dimension_semantics = [#tpu.dimension_semantics<parallel>, #tpu.dimension_semantics<arbitrary>], iteration_bounds = array<i64: 2, 1>, scalar_prefetch = 0 : i64, scratch_operands = 1 : i64, tpu.core_type = #tpu.core_type<tc>, window_params = [{transform_indices = @transform_0, window_bounds = array<i64: 1, 16, 128>}, {pipeline_mode = #tpu.pipeline_mode<synchronous>, transform_indices = @transform_1, window_bounds = array<i64: 128, 1024>}, {pipeline_mode = #tpu.pipeline_mode<synchronous>, transform_indices = @transform_2, window_bounds = array<i64: 1, 1024>}, {pipeline_mode = #tpu.pipeline_mode<synchronous>, transform_indices = @transform_3, window_bounds = array<i64: 1024, 256>}, {pipeline_mode = #tpu.pipeline_mode<synchronous>, transform_indices = @transform_4, window_bounds = array<i64: 1, 256>}, {pipeline_mode = #tpu.pipeline_mode<synchronous>, transform_indices = @transform_5, window_bounds = array<i64: 256, 256>}, {pipeline_mode = #tpu.pipeline_mode<synchronous>, transform_indices = @transform_6, window_bounds = array<i64: 1, 256>}, {pipeline_mode = #tpu.pipeline_mode<synchronous>, transform_indices = @transform_7, window_bounds = array<i64: 256, 128>}, {pipeline_mode = #tpu.pipeline_mode<synchronous>, transform_indices = @transform_8, window_bounds = array<i64: 1, 128>}, {transform_indices = @transform_9, window_bounds = array<i64: 1, 1, 128>}]} {
    %c0_i32 = arith.constant 0 : i32
    %0 = arith.cmpi eq, %arg1, %c0_i32 : i32
    %1 = arith.extui %0 : i1 to i32
    %c0_i32_0 = arith.constant 0 : i32
    %2 = arith.cmpi ne, %1, %c0_i32_0 : i32
    scf.if %2 {
      %cst_21 = arith.constant 0.000000e+00 : f32
      %28 = vector.broadcast %cst_21 : f32 to vector<1x256xf32>
      %c0_22 = arith.constant 0 : index
      %c0_23 = arith.constant 0 : index
      %29 = vector.load %arg12[%c0_22, %c0_23] : memref<1x256xf32, #tpu.memory_space<vmem>>, vector<1x256xf32>
      tpu.vector_store %arg12[%c0_22, %c0_23], %28 {strides = array<i32>} : memref<1x256xf32, #tpu.memory_space<vmem>>, vector<1x256xf32>,
    } else {
    }
    %c0 = arith.constant 0 : index
    %c0_1 = arith.constant 0 : index
    %c0_2 = arith.constant 0 : index
    %3 = vector.load %arg2[%c0, %c0_1, %c0_2] : memref<1x16x128xbf16, #tpu.memory_space<vmem>>, vector<1x16x128xbf16>
    %4 = vector.shape_cast %3 : vector<1x16x128xbf16> to vector<16x128xbf16>
    %c0_3 = arith.constant 0 : index
    %c0_4 = arith.constant 0 : index
    %5 = vector.load %arg3[%c0_3, %c0_4] : memref<128x1024xbf16, #tpu.memory_space<vmem>>, vector<128x1024xbf16>
    %cst = arith.constant dense<0.000000e+00> : vector<16x1024xf32>
    %6 = tpu.matmul %4, %5, %cst {dimension_numbers = #tpu.dot_dimension_numbers<[1], [0], [0], [1], [0, 0, 1, 1], [], []>} : vector<16x128xbf16>, vector<128x1024xbf16>, vector<16x1024xf32> -> vector<16x1024xf32>
    %c0_5 = arith.constant 0 : index
    %c0_6 = arith.constant 0 : index
    %7 = vector.load %arg4[%c0_5, %c0_6] : memref<1x1024xf32, #tpu.memory_space<vmem>>, vector<1x1024xf32>
    %8 = vector.broadcast %7 : vector<1x1024xf32> to vector<16x1024xf32>
    %9 = arith.addf %6, %8 : vector<16x1024xf32>
    %cst_7 = arith.constant 0.000000e+00 : f32
    %10 = vector.broadcast %cst_7 : f32 to vector<16x1024xf32>
    %11 = arith.maximumf %9, %10 : vector<16x1024xf32>
    %12 = arith.truncf %11 : vector<16x1024xf32> to vector<16x1024xbf16>
    %c0_8 = arith.constant 0 : index
    %c0_9 = arith.constant 0 : index
    %13 = vector.load %arg5[%c0_8, %c0_9] : memref<1024x256xbf16, #tpu.memory_space<vmem>>, vector<1024x256xbf16>
    %cst_10 = arith.constant dense<0.000000e+00> : vector<16x256xf32>
    %14 = tpu.matmul %12, %13, %cst_10 {dimension_numbers = #tpu.dot_dimension_numbers<[1], [0], [0], [1], [0, 0, 1, 1], [], []>} : vector<16x1024xbf16>, vector<1024x256xbf16>, vector<16x256xf32> -> vector<16x256xf32>
    %c0_11 = arith.constant 0 : index
    %c0_12 = arith.constant 0 : index
    %15 = vector.load %arg6[%c0_11, %c0_12] : memref<1x256xf32, #tpu.memory_space<vmem>>, vector<1x256xf32>
    %16 = vector.broadcast %15 : vector<1x256xf32> to vector<16x256xf32>
    %17 = arith.addf %14, %16 : vector<16x256xf32>
    %cst_13 = arith.constant 0.000000e+00 : f32
    %18 = vector.broadcast %cst_13 : f32 to vector<16x256xf32>
    %19 = arith.maximumf %17, %18 : vector<16x256xf32>
    %c0_14 = arith.constant 0 : index
    %c0_15 = arith.constant 0 : index
    %20 = vector.load %arg12[%c0_14, %c0_15] : memref<1x256xf32, #tpu.memory_space<vmem>>, vector<1x256xf32>
    %cst_16 = arith.constant dense<0xFF800000> : vector<256xf32>
    %21 = vector.multi_reduction <maximumf>, %19, %cst_16 [0] : vector<16x256xf32> to vector<256xf32>
    %22 = vector.shape_cast %21 : vector<256xf32> to vector<1x256xf32>
    %23 = arith.maximumf %20, %22 : vector<1x256xf32>
    %c0_17 = arith.constant 0 : index
    %c0_18 = arith.constant 0 : index
    %24 = vector.load %arg12[%c0_17, %c0_18] : memref<1x256xf32, #tpu.memory_space<vmem>>, vector<1x256xf32>
    tpu.vector_store %arg12[%c0_17, %c0_18], %23 {strides = array<i32>} : memref<1x256xf32, #tpu.memory_space<vmem>>, vector<1x256xf32>,
    %c0_i32_19 = arith.constant 0 : i32
    %25 = arith.cmpi eq, %arg1, %c0_i32_19 : i32
    %26 = arith.extui %25 : i1 to i32
    %c0_i32_20 = arith.constant 0 : i32
    %27 = arith.cmpi ne, %26, %c0_i32_20 : i32
    scf.if %27 {
      %c0_21 = arith.constant 0 : index
      %c0_22 = arith.constant 0 : index
      %28 = vector.load %arg12[%c0_21, %c0_22] : memref<1x256xf32, #tpu.memory_space<vmem>>, vector<1x256xf32>
      %29 = arith.truncf %28 : vector<1x256xf32> to vector<1x256xbf16>
      %c0_23 = arith.constant 0 : index
      %c0_24 = arith.constant 0 : index
      %30 = vector.load %arg7[%c0_23, %c0_24] : memref<256x256xbf16, #tpu.memory_space<vmem>>, vector<256x256xbf16>
      %cst_25 = arith.constant dense<0.000000e+00> : vector<1x256xf32>
      %31 = tpu.matmul %29, %30, %cst_25 {dimension_numbers = #tpu.dot_dimension_numbers<[1], [0], [0], [1], [0, 0, 1, 1], [], []>} : vector<1x256xbf16>, vector<256x256xbf16>, vector<1x256xf32> -> vector<1x256xf32>
      %c0_26 = arith.constant 0 : index
      %c0_27 = arith.constant 0 : index
      %32 = vector.load %arg8[%c0_26, %c0_27] : memref<1x256xf32, #tpu.memory_space<vmem>>, vector<1x256xf32>
      %33 = arith.addf %31, %32 : vector<1x256xf32>
      %cst_28 = arith.constant 0.000000e+00 : f32
      %34 = vector.broadcast %cst_28 : f32 to vector<1x256xf32>
      %35 = arith.maximumf %33, %34 : vector<1x256xf32>
      %c0_29 = arith.constant 0 : index
      %c0_30 = arith.constant 0 : index
      %36 = vector.load %arg9[%c0_29, %c0_30] : memref<256x128xf32, #tpu.memory_space<vmem>>, vector<256x128xf32>
      %cst_31 = arith.constant dense<0.000000e+00> : vector<1x128xf32>
      %37 = tpu.matmul %35, %36, %cst_31 {dimension_numbers = #tpu.dot_dimension_numbers<[1], [0], [0], [1], [0, 0, 1, 1], [], []>} : vector<1x256xf32>, vector<256x128xf32>, vector<1x128xf32> -> vector<1x128xf32>
      %c0_32 = arith.constant 0 : index
      %c0_33 = arith.constant 0 : index
      %38 = vector.load %arg10[%c0_32, %c0_33] : memref<1x128xf32, #tpu.memory_space<vmem>>, vector<1x128xf32>
      %39 = arith.addf %37, %38 : vector<1x128xf32>
      %c0_34 = arith.constant 0 : index
      %c0_35 = arith.constant 0 : index
      %c0_36 = arith.constant 0 : index
      %40 = vector.load %arg11[%c0_34, %c0_35, %c0_36] : memref<1x1x128xf32, #tpu.memory_space<vmem>>, vector<1x1x128xf32>
      %41 = vector.shape_cast %40 : vector<1x1x128xf32> to vector<1x128xf32>
      %42 = vector.shape_cast %39 : vector<1x128xf32> to vector<1x1x128xf32>
      tpu.vector_store %arg11[%c0_34, %c0_35, %c0_36], %42 {strides = array<i32>} : memref<1x1x128xf32, #tpu.memory_space<vmem>>, vector<1x1x128xf32>,
    } else {
    }
    return
  }
  func.func @transform_0(%arg0: i32, %arg1: i32) -> (i32, i32, i32) {
    %c0_i32 = arith.constant 0 : i32
    %c0_i32_0 = arith.constant 0 : i32
    return %arg0, %arg1, %c0_i32 : i32, i32, i32
  }
  func.func @transform_1(%arg0: i32, %arg1: i32) -> (i32, i32) {
    %c0_i32 = arith.constant 0 : i32
    %c0_i32_0 = arith.constant 0 : i32
    %c0_i32_1 = arith.constant 0 : i32
    return %c0_i32, %c0_i32_0 : i32, i32
  }
  func.func @transform_2(%arg0: i32, %arg1: i32) -> (i32, i32) {
    %c0_i32 = arith.constant 0 : i32
    %c0_i32_0 = arith.constant 0 : i32
    %c0_i32_1 = arith.constant 0 : i32
    return %c0_i32, %c0_i32_0 : i32, i32
  }
  func.func @transform_3(%arg0: i32, %arg1: i32) -> (i32, i32) {
    %c0_i32 = arith.constant 0 : i32
    %c0_i32_0 = arith.constant 0 : i32
    %c0_i32_1 = arith.constant 0 : i32
    return %c0_i32, %c0_i32_0 : i32, i32
  }
  func.func @transform_4(%arg0: i32, %arg1: i32) -> (i32, i32) {
    %c0_i32 = arith.constant 0 : i32
    %c0_i32_0 = arith.constant 0 : i32
    %c0_i32_1 = arith.constant 0 : i32
    return %c0_i32, %c0_i32_0 : i32, i32
  }
  func.func @transform_5(%arg0: i32, %arg1: i32) -> (i32, i32) {
    %c0_i32 = arith.constant 0 : i32
    %c0_i32_0 = arith.constant 0 : i32
    %c0_i32_1 = arith.constant 0 : i32
    return %c0_i32, %c0_i32_0 : i32, i32
  }
  func.func @transform_6(%arg0: i32, %arg1: i32) -> (i32, i32) {
    %c0_i32 = arith.constant 0 : i32
    %c0_i32_0 = arith.constant 0 : i32
    %c0_i32_1 = arith.constant 0 : i32
    return %c0_i32, %c0_i32_0 : i32, i32
  }
  func.func @transform_7(%arg0: i32, %arg1: i32) -> (i32, i32) {
    %c0_i32 = arith.constant 0 : i32
    %c0_i32_0 = arith.constant 0 : i32
    %c0_i32_1 = arith.constant 0 : i32
    return %c0_i32, %c0_i32_0 : i32, i32
  }
  func.func @transform_8(%arg0: i32, %arg1: i32) -> (i32, i32) {
    %c0_i32 = arith.constant 0 : i32
    %c0_i32_0 = arith.constant 0 : i32
    %c0_i32_1 = arith.constant 0 : i32
    return %c0_i32, %c0_i32_0 : i32, i32
  }
  func.func @transform_9(%arg0: i32, %arg1: i32) -> (i32, i32, i32) {
    %c0_i32 = arith.constant 0 : i32
    %c0_i32_0 = arith.constant 0 : i32
    %c0_i32_1 = arith.constant 0 : i32
    return %arg0, %c0_i32, %c0_i32_0 : i32, i32, i32
  }
}

</mosaic_0001>

<llo_original>
// kernel: tpu_custom_call.1
$region0: #{tpu_custom_call.1}
  #allocation0 [shape = 'u32[]', space=smem, size = 0x4, offset = 0x4, fixed_abs, tag = 'smem constant byte address 0x4 - core index']
  #allocation1 [shape = 'u32[144,128]{1,0:T(1,128)}', space=vmem, size = 0x12000, scoped, tag = 'internal scratch']
  #allocation2 [shape = 'f32[1,256]{1,0:T(1,128)}', space=vmem, size = 0x400, scoped, tag = 'scratch operand']
  %s0 = inlined_call_operand.hbm [shape: bf16[2,16,128], index: 0, kind: input, shape index: {}]
  %s1 = inlined_call_operand.hbm [shape: bf16[128,1024], index: 1, kind: input, shape index: {}]
  %s2 = inlined_call_operand.hbm [shape: f32[1,1024], index: 2, kind: input, shape index: {}]
  %s3 = inlined_call_operand.hbm [shape: bf16[1024,256], index: 3, kind: input, shape index: {}]
  %s4 = inlined_call_operand.vmem [shape: f32[1,256], index: 4, kind: input, shape index: {}]
  %s5 = inlined_call_operand.hbm [shape: bf16[256,256], index: 5, kind: input, shape index: {}]
  %s6 = inlined_call_operand.vmem [shape: f32[1,256], index: 6, kind: input, shape index: {}]
  %s7 = inlined_call_operand.hbm [shape: f32[256,128], index: 7, kind: input, shape index: {}]
  %s8 = inlined_call_operand.vmem [shape: f32[1,128], index: 8, kind: input, shape index: {}]
  %s9 = inlined_call_operand.hbm [shape: f32[2,1,128], index: 9, kind: output, shape index: {}]
  %s10 = sld [smem:[#allocation0]]
  $region101: #{tpu_custom_call.1} parent=0
    _
  %s12 = ssub.s32 1, %s10
  %s13 = scalar_select 0, %s12, %s10
  $region1: #{tpu_custom_call.1} parent=0
    #allocation3 [shape = 'u8[8192]{0}', space=vmem, size = 0x2000, scoped, tag = 'input window, operand 0']
    #allocation4 [shape = 's32[2]{0}', space=sflag, size = 0x8, scoped, tag = 'scoped memory for tpu_custom_call.1']
    #allocation5 [shape = 's32[2]{0}', space=sflag, size = 0x8, scoped, tag = 'scoped memory for tpu_custom_call.1']
    #allocation6 [shape = 'u8[262144]{0}', space=vmem, size = 0x40000, scoped, tag = 'input window, operand 1, single buffered']
    #allocation7 [shape = 's32[1]{0}', space=sflag, size = 0x4, scoped, tag = 'scoped memory for tpu_custom_call.1']
    #allocation8 [shape = 'u8[4096]{0}', space=vmem, size = 0x1000, scoped, tag = 'input window, operand 2, single buffered']
    #allocation9 [shape = 'u8[524288]{0}', space=vmem, size = 0x80000, scoped, tag = 'input window, operand 3, single buffered']
    #allocation10 [shape = 's32[1]{0}', space=sflag, size = 0x4, scoped, tag = 'scoped memory for tpu_custom_call.1']
    #allocation11 [shape = 'u8[131072]{0}', space=vmem, size = 0x20000, scoped, tag = 'input window, operand 5, single buffered']
    #allocation12 [shape = 'u8[131072]{0}', space=vmem, size = 0x20000, scoped, tag = 'input window, operand 7, single buffered']
    #allocation13 [shape = 's32[1]{0}', space=sflag, size = 0x4, scoped, tag = 'scoped memory for tpu_custom_call.1']
    #allocation14 [shape = 'u8[1024]{0}', space=vmem, size = 0x400, scoped, tag = 'output window, operand 0']
    %14 = vsyncpa [#allocation4], 0
    %s15 = scalar_lea.sflag [#allocation4], 1
    %16 = vsyncpa %s15, 0
    %17 = vsyncpa [#allocation7], 0
    %18 = vsyncpa [#allocation10], 0
    %19 = vsyncpa [#allocation13], 0
    %20 = vsyncpa [#allocation5], 0
    %s21 = scalar_lea.sflag [#allocation5], 1
    %22 = vsyncpa %s21, 0
    loop: start=0, step=1, limit=4
    $region2: #{tpu_custom_call.1} parent=1 // loop_pre_header
      _
    $region3: #{tpu_custom_call.1} parent=1 // loop_header
      %s24 = sphi 0, %s28
      %p25 = scmp.ge.s32.totalorder %s24, 4
      %s31 = sphi 0, %s43
      %s32 = sphi 0, %s39
      %s33 = sphi 0, %s31
      %s34 = sphi 0, %s32
      %s35 = sphi 0, %s33
      %s36 = sphi 0, %s34
      %s48 = sphi 0, %s50
      %s51 = sphi 0, %s48
      %s52 = sphi 0, %s51
      %s68 = sphi 0, %s52
      %s72 = sphi 0, %s72
      %s74 = sphi 0, %s72
      %s75 = sphi 0, %s74
      %s89 = sphi 0, %s75
      %s93 = sphi 0, %s93
      %s95 = sphi 0, %s93
      %s96 = sphi 0, %s95
      %s110 = sphi 0, %s96
      %s114 = sphi 0, %s114
      %s116 = sphi 0, %s114
      %s117 = sphi 0, %s116
      %s131 = sphi 0, %s117
      %s135 = sphi 0, %s135
      %s137 = sphi 0, %s135
      %s138 = sphi 0, %s137
      %s152 = sphi 0, %s138
      %s156 = sphi 0, %s156
      %s158 = sphi 0, %s156
      %s159 = sphi 0, %s158
      %s173 = sphi 0, %s159
      %s177 = sphi 0, %s177
      %s179 = sphi 0, %s177
      %s180 = sphi 0, %s179
      %s194 = sphi 0, %s180
      %s198 = sphi 0, %s198
      %s200 = sphi 0, %s198
      %s201 = sphi 0, %s200
      %s215 = sphi 0, %s201
      %s219 = sphi 0, %s219
      %s221 = sphi 0, %s219
      %s222 = sphi 0, %s221
      %s236 = sphi 0, %s222
      %s242 = sphi 0, %s244
      %s245 = sphi 0, %s242
      %s246 = sphi 0, %s245
      %s262 = sphi 0, %s246
    $region4: #{tpu_custom_call.1} parent=1 // loop_header_branch
      %27 = sbr.rel (%p25) target = $region8
    $region5: #{tpu_custom_call.1} parent=1 // loop_body
      %s29 = ssub.s32 %s24, 1
      %s30 = ssub.s32 %s24, 2
      %s37 = sadd.s32 1, %s32
      %p38 = scmp.ge.s32.totalorder %s37, 1
      %s39 = scalar_select %p38, 0, %s37
      %s40 = sadd.s32 1, %s31
      %s41 = scalar_select %p38, %s40, %s31
      %p42 = scmp.ge.s32.totalorder %s41, 2
      %s43 = scalar_select %p42, 0, %s41
      %s44 = ssub.s32 %s31, %s43
      %s45 = ssub.s32 %s32, %s39
      %s46 = sor.u32 %s44, %s45
      %p47 = scmp.eq.s32.totalorder %s46, 0
      %s49 = sadd.s32 %s48, 1
      %s50 = scalar_select %p47, %s48, %s49
      %p53 = pneg %p47
      %p54 = scmp.eq.s32.totalorder %s24, 1
      %p55 = por %p53, %p54
      %p56 = scmp.ne.s32.totalorder %s48, %s51
      %p57 = scmp.eq.s32.totalorder %s24, 0
      %p58 = por %p56, %p57
      %p59 = scmp.ne.s32.totalorder %s48, %s51
      %p60 = scmp.eq.s32.totalorder %s29, 1
      %p61 = por %p59, %p60
      %p62 = scmp.ne.s32.totalorder %s51, %s52
      %p63 = scmp.eq.s32.totalorder %s29, 0
      %p64 = por %p62, %p63
      %p65 = scmp.ne.s32.totalorder %s51, %s52
      %p66 = scmp.eq.s32.totalorder %s30, 1
      %p67 = por %p65, %p66
      %p69 = scmp.ne.s32.totalorder %s52, %s68
      %p70 = scmp.eq.s32.totalorder %s30, 0
      %p71 = por %p69, %p70
      %s73 = sadd.s32 %s72, 1
      %p76 = scmp.eq.s32.totalorder %s24, 1
      %p77 = scmp.ne.s32.totalorder %s72, %s74
      %p78 = scmp.eq.s32.totalorder %s24, 0
      %p79 = por %p77, %p78
      %p80 = scmp.ne.s32.totalorder %s72, %s74
      %p81 = scmp.eq.s32.totalorder %s29, 1
      %p82 = por %p80, %p81
      %p83 = scmp.ne.s32.totalorder %s74, %s75
      %p84 = scmp.eq.s32.totalorder %s29, 0
      %p85 = por %p83, %p84
      %p86 = scmp.ne.s32.totalorder %s74, %s75
      %p87 = scmp.eq.s32.totalorder %s30, 1
      %p88 = por %p86, %p87
      %p90 = scmp.ne.s32.totalorder %s75, %s89
      %p91 = scmp.eq.s32.totalorder %s30, 0
      %p92 = por %p90, %p91
      %s94 = sadd.s32 %s93, 1
      %p97 = scmp.eq.s32.totalorder %s24, 1
      %p98 = scmp.ne.s32.totalorder %s93, %s95
      %p99 = scmp.eq.s32.totalorder %s24, 0
      %p100 = por %p98, %p99
      %p101 = scmp.ne.s32.totalorder %s93, %s95
      %p102 = scmp.eq.s32.totalorder %s29, 1
      %p103 = por %p101, %p102
      %p104 = scmp.ne.s32.totalorder %s95, %s96
      %p105 = scmp.eq.s32.totalorder %s29, 0
      %p106 = por %p104, %p105
      %p107 = scmp.ne.s32.totalorder %s95, %s96
      %p108 = scmp.eq.s32.totalorder %s30, 1
      %p109 = por %p107, %p108
      %p111 = scmp.ne.s32.totalorder %s96, %s110
      %p112 = scmp.eq.s32.totalorder %s30, 0
      %p113 = por %p111, %p112
      %s115 = sadd.s32 %s114, 1
      %p118 = scmp.eq.s32.totalorder %s24, 1
      %p119 = scmp.ne.s32.totalorder %s114, %s116
      %p120 = scmp.eq.s32.totalorder %s24, 0
      %p121 = por %p119, %p120
      %p122 = scmp.ne.s32.totalorder %s114, %s116
      %p123 = scmp.eq.s32.totalorder %s29, 1
      %p124 = por %p122, %p123
      %p125 = scmp.ne.s32.totalorder %s116, %s117
      %p126 = scmp.eq.s32.totalorder %s29, 0
      %p127 = por %p125, %p126
      %p128 = scmp.ne.s32.totalorder %s116, %s117
      %p129 = scmp.eq.s32.totalorder %s30, 1
      %p130 = por %p128, %p129
      %p132 = scmp.ne.s32.totalorder %s117, %s131
      %p133 = scmp.eq.s32.totalorder %s30, 0
      %p134 = por %p132, %p133
      %s136 = sadd.s32 %s135, 1
      %p139 = scmp.eq.s32.totalorder %s24, 1
      %p140 = scmp.ne.s32.totalorder %s135, %s137
      %p141 = scmp.eq.s32.totalorder %s24, 0
      %p142 = por %p140, %p141
      %p143 = scmp.ne.s32.totalorder %s135, %s137
      %p144 = scmp.eq.s32.totalorder %s29, 1
      %p145 = por %p143, %p144
      %p146 = scmp.ne.s32.totalorder %s137, %s138
      %p147 = scmp.eq.s32.totalorder %s29, 0
      %p148 = por %p146, %p147
      %p149 = scmp.ne.s32.totalorder %s137, %s138
      %p150 = scmp.eq.s32.totalorder %s30, 1
      %p151 = por %p149, %p150
      %p153 = scmp.ne.s32.totalorder %s138, %s152
      %p154 = scmp.eq.s32.totalorder %s30, 0
      %p155 = por %p153, %p154
      %s157 = sadd.s32 %s156, 1
      %p160 = scmp.eq.s32.totalorder %s24, 1
      %p161 = scmp.ne.s32.totalorder %s156, %s158
      %p162 = scmp.eq.s32.totalorder %s24, 0
      %p163 = por %p161, %p162
      %p164 = scmp.ne.s32.totalorder %s156, %s158
      %p165 = scmp.eq.s32.totalorder %s29, 1
      %p166 = por %p164, %p165
      %p167 = scmp.ne.s32.totalorder %s158, %s159
      %p168 = scmp.eq.s32.totalorder %s29, 0
      %p169 = por %p167, %p168
      %p170 = scmp.ne.s32.totalorder %s158, %s159
      %p171 = scmp.eq.s32.totalorder %s30, 1
      %p172 = por %p170, %p171
      %p174 = scmp.ne.s32.totalorder %s159, %s173
      %p175 = scmp.eq.s32.totalorder %s30, 0
      %p176 = por %p174, %p175
      %s178 = sadd.s32 %s177, 1
      %p181 = scmp.eq.s32.totalorder %s24, 1
      %p182 = scmp.ne.s32.totalorder %s177, %s179
      %p183 = scmp.eq.s32.totalorder %s24, 0
      %p184 = por %p182, %p183
      %p185 = scmp.ne.s32.totalorder %s177, %s179
      %p186 = scmp.eq.s32.totalorder %s29, 1
      %p187 = por %p185, %p186
      %p188 = scmp.ne.s32.totalorder %s179, %s180
      %p189 = scmp.eq.s32.totalorder %s29, 0
      %p190 = por %p188, %p189
      %p191 = scmp.ne.s32.totalorder %s179, %s180
      %p192 = scmp.eq.s32.totalorder %s30, 1
      %p193 = por %p191, %p192
      %p195 = scmp.ne.s32.totalorder %s180, %s194
      %p196 = scmp.eq.s32.totalorder %s30, 0
      %p197 = por %p195, %p196
      %s199 = sadd.s32 %s198, 1
      %p202 = scmp.eq.s32.totalorder %s24, 1
      %p203 = scmp.ne.s32.totalorder %s198, %s200
      %p204 = scmp.eq.s32.totalorder %s24, 0
      %p205 = por %p203, %p204
      %p206 = scmp.ne.s32.totalorder %s198, %s200
      %p207 = scmp.eq.s32.totalorder %s29, 1
      %p208 = por %p206, %p207
      %p209 = scmp.ne.s32.totalorder %s200, %s201
      %p210 = scmp.eq.s32.totalorder %s29, 0
      %p211 = por %p209, %p210
      %p212 = scmp.ne.s32.totalorder %s200, %s201
      %p213 = scmp.eq.s32.totalorder %s30, 1
      %p214 = por %p212, %p213
      %p216 = scmp.ne.s32.totalorder %s201, %s215
      %p217 = scmp.eq.s32.totalorder %s30, 0
      %p218 = por %p216, %p217
      %s220 = sadd.s32 %s219, 1
      %p223 = scmp.eq.s32.totalorder %s24, 1
      %p224 = scmp.ne.s32.totalorder %s219, %s221
      %p225 = scmp.eq.s32.totalorder %s24, 0
      %p226 = por %p224, %p225
      %p227 = scmp.ne.s32.totalorder %s219, %s221
      %p228 = scmp.eq.s32.totalorder %s29, 1
      %p229 = por %p227, %p228
      %p230 = scmp.ne.s32.totalorder %s221, %s222
      %p231 = scmp.eq.s32.totalorder %s29, 0
      %p232 = por %p230, %p231
      %p233 = scmp.ne.s32.totalorder %s221, %s222
      %p234 = scmp.eq.s32.totalorder %s30, 1
      %p235 = por %p233, %p234
      %p237 = scmp.ne.s32.totalorder %s222, %s236
      %p238 = scmp.eq.s32.totalorder %s30, 0
      %p239 = por %p237, %p238
      %s240 = ssub.s32 %s31, %s43
      %p241 = scmp.eq.s32.totalorder %s240, 0
      %s243 = sadd.s32 %s242, 1
      %s244 = scalar_select %p241, %s242, %s243
      %p247 = pneg %p241
      %p248 = scmp.eq.s32.totalorder %s24, 1
      %p249 = por %p247, %p248
      %p250 = scmp.ne.s32.totalorder %s242, %s245
      %p251 = scmp.eq.s32.totalorder %s24, 0
      %p252 = por %p250, %p251
      %p253 = scmp.ne.s32.totalorder %s242, %s245
      %p254 = scmp.eq.s32.totalorder %s29, 1
      %p255 = por %p253, %p254
      %p256 = scmp.ne.s32.totalorder %s245, %s246
      %p257 = scmp.eq.s32.totalorder %s29, 0
      %p258 = por %p256, %p257
      %p259 = scmp.ne.s32.totalorder %s245, %s246
      %p260 = scmp.eq.s32.totalorder %s30, 1
      %p261 = por %p259, %p260
      %p263 = scmp.ne.s32.totalorder %s246, %s262
      %p264 = scmp.eq.s32.totalorder %s30, 0
      %p265 = por %p263, %p264
      %p266 = scmp.le.s32.totalorder 1, %s24
      %p267 = scmp.lt.s32.totalorder %s24, 3
      %p268 = pnand %p266, %p267
      %p269 = pneg %p268
      // Predicated region
      $region9: #{tpu_custom_call.1} parent=5 // pred_check
        _
      $region10: #{tpu_custom_call.1} parent=5 // pred_check_branch
        %271 = sbr.rel (%p268) target = $region12
      $region11: #{tpu_custom_call.1} parent=5 // pred_region
        %s272 = ssub.s32 %s24, 1
        // Predicated region
        $region13: #{tpu_custom_call.1} parent=11 // pred_check
          %p273 = pneg %p85
        $region14: #{tpu_custom_call.1} parent=11 // pred_check_branch
          %275 = sbr.rel (%p273) target = $region16
        $region15: #{tpu_custom_call.1} parent=11 // pred_region
          %s277 = ssub.s32 8192, 8192
          %278 = vsyncadd [#allocation7], %s277
          %s279 = sshll.u32 [#allocation6], 4
          %s280 = int_to_ptr.vmem [resolvable:$true] %s279
          %285 = dma.hbm_to_vmem [thread:$0]  %s1, 8192, %s280, [#allocation7], 512, 512, 32
        $region16: #{tpu_custom_call.1} parent=11 // pred_fallthru
          _
        // Predicated region
        $region17: #{tpu_custom_call.1} parent=11 // pred_check
          %p286 = pneg %p106
        $region18: #{tpu_custom_call.1} parent=11 // pred_check_branch
          %288 = sbr.rel (%p286) target = $region20
        $region19: #{tpu_custom_call.1} parent=11 // pred_region
          %s290 = ssub.s32 128, 128
          %291 = vsyncadd [#allocation7], %s290
          %s293 = sshll.u32 [#allocation8], 4
          %s294 = int_to_ptr.vmem [resolvable:$true] %s293
          %296 = dma.hbm_to_vmem [thread:$0]  %s2, 128, %s294, [#allocation7]
        $region20: #{tpu_custom_call.1} parent=11 // pred_fallthru
          _
        // Predicated region
        $region21: #{tpu_custom_call.1} parent=11 // pred_check
          %p297 = pneg %p127
        $region22: #{tpu_custom_call.1} parent=11 // pred_check_branch
          %299 = sbr.rel (%p297) target = $region24
        $region23: #{tpu_custom_call.1} parent=11 // pred_region
          %s301 = ssub.s32 16384, 16384
          %302 = vsyncadd [#allocation10], %s301
          %s303 = sshll.u32 [#allocation9], 4
          %s304 = int_to_ptr.vmem [resolvable:$true] %s303
          %309 = dma.hbm_to_vmem [thread:$0]  %s3, 16384, %s304, [#allocation10], 128, 128, 8
        $region24: #{tpu_custom_call.1} parent=11 // pred_fallthru
          _
        // Predicated region
        $region25: #{tpu_custom_call.1} parent=11 // pred_check
          %p310 = pneg %p148
        $region26: #{tpu_custom_call.1} parent=11 // pred_check_branch
          %312 = sbr.rel (%p310) target = $region28
        $region27: #{tpu_custom_call.1} parent=11 // pred_region
          _
        $region28: #{tpu_custom_call.1} parent=11 // pred_fallthru
          _
        // Predicated region
        $region29: #{tpu_custom_call.1} parent=11 // pred_check
          %p313 = pneg %p169
        $region30: #{tpu_custom_call.1} parent=11 // pred_check_branch
          %315 = sbr.rel (%p313) target = $region32
        $region31: #{tpu_custom_call.1} parent=11 // pred_region
          %s317 = ssub.s32 4096, 4096
          %318 = vsyncadd [#allocation10], %s317
          %s319 = sshll.u32 [#allocation11], 4
          %s320 = int_to_ptr.vmem [resolvable:$true] %s319
          %325 = dma.hbm_to_vmem [thread:$0]  %s5, 4096, %s320, [#allocation10], 128, 128, 8
        $region32: #{tpu_custom_call.1} parent=11 // pred_fallthru
          _
        // Predicated region
        $region33: #{tpu_custom_call.1} parent=11 // pred_check
          %p326 = pneg %p190
        $region34: #{tpu_custom_call.1} parent=11 // pred_check_branch
          %328 = sbr.rel (%p326) target = $region36
        $region35: #{tpu_custom_call.1} parent=11 // pred_region
          _
        $region36: #{tpu_custom_call.1} parent=11 // pred_fallthru
          _
        // Predicated region
        $region37: #{tpu_custom_call.1} parent=11 // pred_check
          %p329 = pneg %p211
        $region38: #{tpu_custom_call.1} parent=11 // pred_check_branch
          %331 = sbr.rel (%p329) target = $region40
        $region39: #{tpu_custom_call.1} parent=11 // pred_region
          %s333 = ssub.s32 4096, 4096
          %334 = vsyncadd [#allocation13], %s333
          %s335 = sshll.u32 [#allocation12], 4
          %s336 = int_to_ptr.vmem [resolvable:$true] %s335
          %341 = dma.hbm_to_vmem [thread:$0]  %s7, 4096, %s336, [#allocation13], 128, 128, 8
        $region40: #{tpu_custom_call.1} parent=11 // pred_fallthru
          _
        // Predicated region
        $region41: #{tpu_custom_call.1} parent=11 // pred_check
          %p342 = pneg %p232
        $region42: #{tpu_custom_call.1} parent=11 // pred_check_branch
          %344 = sbr.rel (%p342) target = $region44
        $region43: #{tpu_custom_call.1} parent=11 // pred_region
          _
        $region44: #{tpu_custom_call.1} parent=11 // pred_fallthru
          _
      $region12: #{tpu_custom_call.1} parent=5 // pred_fallthru
        _
      %p345 = scmp.lt.s32.totalorder %s24, 2
      // Predicated region
      $region45: #{tpu_custom_call.1} parent=5 // pred_check
        %p346 = pneg %p345
      $region46: #{tpu_custom_call.1} parent=5 // pred_check_branch
        %348 = sbr.rel (%p346) target = $region48
      $region47: #{tpu_custom_call.1} parent=5 // pred_region
        // Predicated region
        $region49: #{tpu_custom_call.1} parent=47 // pred_check
          %p349 = pneg %p58
        $region50: #{tpu_custom_call.1} parent=47 // pred_check_branch
          %351 = sbr.rel (%p349) target = $region52
        $region51: #{tpu_custom_call.1} parent=47 // pred_region
          %s352 = sand.u32 %s48, 1
          %s353 = scalar_lea.sflag [#allocation4], %s352
          %s354 = sand.u32 %s48, 1
          %s355 = smul.addr %s354, 8
          %s356 = scalar_lea.vmem [#allocation3], %s355
          %s357 = smul.u32 2, %s32
          %s359 = ssub.s32 128, 128
          %360 = vsyncadd %s353, %s359
          %s361 = smul.addr %s31, 2
          %s362 = sadd.s32 %s357, %s361
          %s363 = smul.addr %s362, 64
          %s364 = scalar_lea.hbm %s0, %s363
          %s365 = sshll.u32 %s356, 4
          %s366 = int_to_ptr.vmem [resolvable:$true] %s365
          %371 = dma.hbm_to_vmem [thread:$0]  %s364, 128, %s366, %s353, 64, 64, 4
        $region52: #{tpu_custom_call.1} parent=47 // pred_fallthru
          _
      $region48: #{tpu_custom_call.1} parent=5 // pred_fallthru
        _
      %p372 = scmp.le.s32.totalorder 1, %s24
      %p373 = scmp.lt.s32.totalorder %s24, 3
      %p374 = pnand %p372, %p373
      %p375 = pneg %p374
      // Predicated region
      $region53: #{tpu_custom_call.1} parent=5 // pred_check
        _
      $region54: #{tpu_custom_call.1} parent=5 // pred_check_branch
        %377 = sbr.rel (%p374) target = $region56
      $region55: #{tpu_custom_call.1} parent=5 // pred_region
        %s378 = ssub.s32 %s24, 1
        %s379 = sand.u32 %s51, 1
        %s380 = scalar_lea.sflag [#allocation4], %s379
        %s381 = sand.u32 %s51, 1
        %s382 = smul.addr %s381, 8
        %s383 = scalar_lea.vmem [#allocation3], %s382
        // Predicated region
        $region57: #{tpu_custom_call.1} parent=55 // pred_check
          %p384 = pneg %p64
        $region58: #{tpu_custom_call.1} parent=55 // pred_check_branch
          %386 = sbr.rel (%p384) target = $region60
        $region59: #{tpu_custom_call.1} parent=55 // pred_region
          %387 = dma.done %s380, 128
        $region60: #{tpu_custom_call.1} parent=55 // pred_fallthru
          _
        // Predicated region
        $region61: #{tpu_custom_call.1} parent=55 // pred_check
          %p388 = pneg %p85
        $region62: #{tpu_custom_call.1} parent=55 // pred_check_branch
          %390 = sbr.rel (%p388) target = $region64
        $region63: #{tpu_custom_call.1} parent=55 // pred_region
          %391 = dma.done [#allocation7], 8192
        $region64: #{tpu_custom_call.1} parent=55 // pred_fallthru
          _
        // Predicated region
        $region65: #{tpu_custom_call.1} parent=55 // pred_check
          %p392 = pneg %p106
        $region66: #{tpu_custom_call.1} parent=55 // pred_check_branch
          %394 = sbr.rel (%p392) target = $region68
        $region67: #{tpu_custom_call.1} parent=55 // pred_region
          %395 = dma.done [#allocation7], 128
        $region68: #{tpu_custom_call.1} parent=55 // pred_fallthru
          _
        // Predicated region
        $region69: #{tpu_custom_call.1} parent=55 // pred_check
          %p396 = pneg %p127
        $region70: #{tpu_custom_call.1} parent=55 // pred_check_branch
          %398 = sbr.rel (%p396) target = $region72
        $region71: #{tpu_custom_call.1} parent=55 // pred_region
          %399 = dma.done [#allocation10], 16384
        $region72: #{tpu_custom_call.1} parent=55 // pred_fallthru
          _
        // Predicated region
        $region73: #{tpu_custom_call.1} parent=55 // pred_check
          %p400 = pneg %p169
        $region74: #{tpu_custom_call.1} parent=55 // pred_check_branch
          %402 = sbr.rel (%p400) target = $region76
        $region75: #{tpu_custom_call.1} parent=55 // pred_region
          %403 = dma.done [#allocation10], 4096
        $region76: #{tpu_custom_call.1} parent=55 // pred_fallthru
          _
        // Predicated region
        $region77: #{tpu_custom_call.1} parent=55 // pred_check
          %p404 = pneg %p211
        $region78: #{tpu_custom_call.1} parent=55 // pred_check_branch
          %406 = sbr.rel (%p404) target = $region80
        $region79: #{tpu_custom_call.1} parent=55 // pred_region
          %407 = dma.done [#allocation13], 4096
        $region80: #{tpu_custom_call.1} parent=55 // pred_fallthru
          _
        %s408 = sand.u32 %s51, 1
        %s409 = scalar_lea.sflag [#allocation4], %s408
        %s410 = sand.u32 %s51, 1
        %s411 = smul.addr %s410, 8
        %s412 = scalar_lea.vmem [#allocation3], %s411
        %p413 = pneg %p64
        %p414 = pneg %p61
        %p415 = pneg %p85
        %p416 = pneg %p82
        %p417 = pneg %p106
        %p418 = pneg %p103
        %p419 = pneg %p127
        %p420 = pneg %p124
        %p421 = pneg %p148
        %p422 = pneg %p145
        %p423 = pneg %p169
        %p424 = pneg %p166
        %p425 = pneg %p190
        %p426 = pneg %p187
        %p427 = pneg %p211
        %p428 = pneg %p208
        %p429 = pneg %p232
        %p430 = pneg %p229
        %p431 = pneg %p258
        %p432 = pneg %p255
        %s433 = sand.u32 %s245, 1
        %s434 = scalar_lea.sflag [#allocation5], %s433
        %s435 = sand.u32 %s245, 1
        %s436 = scalar_lea.vmem [#allocation14], %s435
        %s437 = smul.u32 2, %s34
        %p439 = scmp.eq.s32.totalorder %s34, 0
        // Predicated region
        $region81: #{tpu_custom_call.1} parent=55 // pred_check
          %p440 = pneg %p439
        $region82: #{tpu_custom_call.1} parent=55 // pred_check_branch
          %442 = sbr.rel (%p440) target = $region84
        $region83: #{tpu_custom_call.1} parent=55 // pred_region
          %v443 = vlaneseq
          %vm444 = vcmp.ge.s32.totalorder %v443, 0
          %vm445 = vcmp.lt.s32.totalorder %v443, 256
          %vm446 = vmand %vm444, %vm445
          %447 = vst.msk [vmem:[#allocation2] sm:$0x3] %vm446, 0.0
        $region84: #{tpu_custom_call.1} parent=55 // pred_fallthru
          _
        %v448 = vld [vmem:[%s383] sm:$0xf]
        %v449 = vld [vmem:[%s383 + $0x4] sm:$0xf]
        %v450 = vld [vmem:[#allocation6] sm:$0xff]
        %v451 = vld [vmem:[#allocation6 + $0x8] sm:$0xff]
        %v452 = vld [vmem:[#allocation6 + $0x10] sm:$0xff]
        %v453 = vld [vmem:[#allocation6 + $0x18] sm:$0xff]
        %v454 = vld [vmem:[#allocation6 + $0x20] sm:$0xff]
        %v455 = vld [vmem:[#allocation6 + $0x28] sm:$0xff]
        %v456 = vld [vmem:[#allocation6 + $0x30] sm:$0xff]
        %v457 = vld [vmem:[#allocation6 + $0x38] sm:$0xff]
        %v458 = vld [vmem:[#allocation6 + $0x40] sm:$0xff]
        %v459 = vld [vmem:[#allocation6 + $0x48] sm:$0xff]
        %v460 = vld [vmem:[#allocation6 + $0x50] sm:$0xff]
        %v461 = vld [vmem:[#allocation6 + $0x58] sm:$0xff]
        %v462 = vld [vmem:[#allocation6 + $0x60] sm:$0xff]
        %v463 = vld [vmem:[#allocation6 + $0x68] sm:$0xff]
        %v464 = vld [vmem:[#allocation6 + $0x70] sm:$0xff]
        %v465 = vld [vmem:[#allocation6 + $0x78] sm:$0xff]
        %v466 = vld [vmem:[#allocation6 + $0x80] sm:$0xff]
        %v467 = vld [vmem:[#allocation6 + $0x88] sm:$0xff]
        %v468 = vld [vmem:[#allocation6 + $0x90] sm:$0xff]
        %v469 = vld [vmem:[#allocation6 + $0x98] sm:$0xff]
        %v470 = vld [vmem:[#allocation6 + $0xa0] sm:$0xff]
        %v471 = vld [vmem:[#allocation6 + $0xa8] sm:$0xff]
        %v472 = vld [vmem:[#allocation6 + $0xb0] sm:$0xff]
        %v473 = vld [vmem:[#allocation6 + $0xb8] sm:$0xff]
        %v474 = vld [vmem:[#allocation6 + $0xc0] sm:$0xff]
        %v475 = vld [vmem:[#allocation6 + $0xc8] sm:$0xff]
        %v476 = vld [vmem:[#allocation6 + $0xd0] sm:$0xff]
        %v477 = vld [vmem:[#allocation6 + $0xd8] sm:$0xff]
        %v478 = vld [vmem:[#allocation6 + $0xe0] sm:$0xff]
        %v479 = vld [vmem:[#allocation6 + $0xe8] sm:$0xff]
        %v480 = vld [vmem:[#allocation6 + $0xf0] sm:$0xff]
        %v481 = vld [vmem:[#allocation6 + $0xf8] sm:$0xff]
        %v482 = vld [vmem:[#allocation6 + $0x100] sm:$0xff]
        %v483 = vld [vmem:[#allocation6 + $0x108] sm:$0xff]
        %v484 = vld [vmem:[#allocation6 + $0x110] sm:$0xff]
        %v485 = vld [vmem:[#allocation6 + $0x118] sm:$0xff]
        %v486 = vld [vmem:[#allocation6 + $0x120] sm:$0xff]
        %v487 = vld [vmem:[#allocation6 + $0x128] sm:$0xff]
        %v488 = vld [vmem:[#allocation6 + $0x130] sm:$0xff]
        %v489 = vld [vmem:[#allocation6 + $0x138] sm:$0xff]
        %v490 = vld [vmem:[#allocation6 + $0x140] sm:$0xff]
        %v491 = vld [vmem:[#allocation6 + $0x148] sm:$0xff]
        %v492 = vld [vmem:[#allocation6 + $0x150] sm:$0xff]
        %v493 = vld [vmem:[#allocation6 + $0x158] sm:$0xff]
        %v494 = vld [vmem:[#allocation6 + $0x160] sm:$0xff]
        %v495 = vld [vmem:[#allocation6 + $0x168] sm:$0xff]
        %v496 = vld [vmem:[#allocation6 + $0x170] sm:$0xff]
        %v497 = vld [vmem:[#allocation6 + $0x178] sm:$0xff]
        %v498 = vld [vmem:[#allocation6 + $0x180] sm:$0xff]
        %v499 = vld [vmem:[#allocation6 + $0x188] sm:$0xff]
        %v500 = vld [vmem:[#allocation6 + $0x190] sm:$0xff]
        %v501 = vld [vmem:[#allocation6 + $0x198] sm:$0xff]
        %v502 = vld [vmem:[#allocation6 + $0x1a0] sm:$0xff]
        %v503 = vld [vmem:[#allocation6 + $0x1a8] sm:$0xff]
        %v504 = vld [vmem:[#allocation6 + $0x1b0] sm:$0xff]
        %v505 = vld [vmem:[#allocation6 + $0x1b8] sm:$0xff]
        %v506 = vld [vmem:[#allocation6 + $0x1c0] sm:$0xff]
        %v507 = vld [vmem:[#allocation6 + $0x1c8] sm:$0xff]
        %v508 = vld [vmem:[#allocation6 + $0x1d0] sm:$0xff]
        %v509 = vld [vmem:[#allocation6 + $0x1d8] sm:$0xff]
        %v510 = vld [vmem:[#allocation6 + $0x1e0] sm:$0xff]
        %v511 = vld [vmem:[#allocation6 + $0x1e8] sm:$0xff]
        %v512 = vld [vmem:[#allocation6 + $0x1f0] sm:$0xff]
        %v513 = vld [vmem:[#allocation6 + $0x1f8] sm:$0xff]
        %v514 = vld [vmem:[#allocation8] sm:$0xff]
        %v516 = vlaneseq
        %v517 = vshrl.u32 %v516, 7
        %v518 = vsub.s32 0, %v517
        %v519 = vrot.slane %v514, %v518
        %v520 = vlaneseq
        %v521 = vshrl.u32 %v520, 7
        %v522 = vsub.s32 1, %v521
        %v523 = vrot.slane %v514, %v522
        %v524 = vlaneseq
        %v525 = vshrl.u32 %v524, 7
        %v526 = vsub.s32 2, %v525
        %v527 = vrot.slane %v514, %v526
        %v528 = vlaneseq
        %v529 = vshrl.u32 %v528, 7
        %v530 = vsub.s32 3, %v529
        %v531 = vrot.slane %v514, %v530
        %v532 = vlaneseq
        %v533 = vshrl.u32 %v532, 7
        %v534 = vsub.s32 4, %v533
        %v535 = vrot.slane %v514, %v534
        %v536 = vlaneseq
        %v537 = vshrl.u32 %v536, 7
        %v538 = vsub.s32 5, %v537
        %v539 = vrot.slane %v514, %v538
        %v540 = vlaneseq
        %v541 = vshrl.u32 %v540, 7
        %v542 = vsub.s32 6, %v541
        %v543 = vrot.slane %v514, %v542
        %v544 = vlaneseq
        %v545 = vshrl.u32 %v544, 7
        %v546 = vsub.s32 7, %v545
        %v547 = vrot.slane %v514, %v546
        %v558 = vunpack.c.l.b16 %v448
        %v559 = vunpack.c.l.b16 %v449
        %v560 = vpack.c.b16 %v559, %v558
        %v626 = vunpack.c.l.b16 %v450
        %v627 = vunpack.c.h.b16 %v450
        %v628 = vunpack.c.l.b16 %v451
        %v629 = vunpack.c.h.b16 %v451
        %v630 = vunpack.c.l.b16 %v452
        %v631 = vunpack.c.h.b16 %v452
        %v632 = vunpack.c.l.b16 %v453
        %v633 = vunpack.c.h.b16 %v453
        %v634 = vunpack.c.l.b16 %v454
        %v635 = vunpack.c.h.b16 %v454
        %v636 = vunpack.c.l.b16 %v455
        %v637 = vunpack.c.h.b16 %v455
        %v638 = vunpack.c.l.b16 %v456
        %v639 = vunpack.c.h.b16 %v456
        %v640 = vunpack.c.l.b16 %v457
        %v641 = vunpack.c.h.b16 %v457
        %v642 = vunpack.c.l.b16 %v458
        %v643 = vunpack.c.h.b16 %v458
        %v644 = vunpack.c.l.b16 %v459
        %v645 = vunpack.c.h.b16 %v459
        %v646 = vunpack.c.l.b16 %v460
        %v647 = vunpack.c.h.b16 %v460
        %v648 = vunpack.c.l.b16 %v461
        %v649 = vunpack.c.h.b16 %v461
        %v650 = vunpack.c.l.b16 %v462
        %v651 = vunpack.c.h.b16 %v462
        %v652 = vunpack.c.l.b16 %v463
        %v653 = vunpack.c.h.b16 %v463
        %v654 = vunpack.c.l.b16 %v464
        %v655 = vunpack.c.h.b16 %v464
        %v656 = vunpack.c.l.b16 %v465
        %v657 = vunpack.c.h.b16 %v465
        %v658 = vunpack.c.l.b16 %v466
        %v659 = vunpack.c.h.b16 %v466
        %v660 = vunpack.c.l.b16 %v467
        %v661 = vunpack.c.h.b16 %v467
        %v662 = vunpack.c.l.b16 %v468
        %v663 = vunpack.c.h.b16 %v468
        %v664 = vunpack.c.l.b16 %v469
        %v665 = vunpack.c.h.b16 %v469
        %v666 = vunpack.c.l.b16 %v470
        %v667 = vunpack.c.h.b16 %v470
        %v668 = vunpack.c.l.b16 %v471
        %v669 = vunpack.c.h.b16 %v471
        %v670 = vunpack.c.l.b16 %v472
        %v671 = vunpack.c.h.b16 %v472
        %v672 = vunpack.c.l.b16 %v473
        %v673 = vunpack.c.h.b16 %v473
        %v674 = vunpack.c.l.b16 %v474
        %v675 = vunpack.c.h.b16 %v474
        %v676 = vunpack.c.l.b16 %v475
        %v677 = vunpack.c.h.b16 %v475
        %v678 = vunpack.c.l.b16 %v476
        %v679 = vunpack.c.h.b16 %v476
        %v680 = vunpack.c.l.b16 %v477
        %v681 = vunpack.c.h.b16 %v477
        %v682 = vunpack.c.l.b16 %v478
        %v683 = vunpack.c.h.b16 %v478
        %v684 = vunpack.c.l.b16 %v479
        %v685 = vunpack.c.h.b16 %v479
        %v686 = vunpack.c.l.b16 %v480
        %v687 = vunpack.c.h.b16 %v480
        %v688 = vunpack.c.l.b16 %v481
        %v689 = vunpack.c.h.b16 %v481
        %v690 = vunpack.c.l.b16 %v482
        %v691 = vunpack.c.h.b16 %v482
        %v692 = vunpack.c.l.b16 %v483
        %v693 = vunpack.c.h.b16 %v483
        %v694 = vunpack.c.l.b16 %v484
        %v695 = vunpack.c.h.b16 %v484
        %v696 = vunpack.c.l.b16 %v485
        %v697 = vunpack.c.h.b16 %v485
        %v698 = vunpack.c.l.b16 %v486
        %v699 = vunpack.c.h.b16 %v486
        %v700 = vunpack.c.l.b16 %v487
        %v701 = vunpack.c.h.b16 %v487
        %v702 = vunpack.c.l.b16 %v488
        %v703 = vunpack.c.h.b16 %v488
        %v704 = vunpack.c.l.b16 %v489
        %v705 = vunpack.c.h.b16 %v489
        %v706 = vunpack.c.l.b16 %v490
        %v707 = vunpack.c.h.b16 %v490
        %v708 = vunpack.c.l.b16 %v491
        %v709 = vunpack.c.h.b16 %v491
        %v710 = vunpack.c.l.b16 %v492
        %v711 = vunpack.c.h.b16 %v492
        %v712 = vunpack.c.l.b16 %v493
        %v713 = vunpack.c.h.b16 %v493
        %v714 = vunpack.c.l.b16 %v494
        %v715 = vunpack.c.h.b16 %v494
        %v716 = vunpack.c.l.b16 %v495
        %v717 = vunpack.c.h.b16 %v495
        %v718 = vunpack.c.l.b16 %v496
        %v719 = vunpack.c.h.b16 %v496
        %v720 = vunpack.c.l.b16 %v497
        %v721 = vunpack.c.h.b16 %v497
        %v722 = vunpack.c.l.b16 %v498
        %v723 = vunpack.c.h.b16 %v498
        %v724 = vunpack.c.l.b16 %v499
        %v725 = vunpack.c.h.b16 %v499
        %v726 = vunpack.c.l.b16 %v500
        %v727 = vunpack.c.h.b16 %v500
        %v728 = vunpack.c.l.b16 %v501
        %v729 = vunpack.c.h.b16 %v501
        %v730 = vunpack.c.l.b16 %v502
        %v731 = vunpack.c.h.b16 %v502
        %v732 = vunpack.c.l.b16 %v503
        %v733 = vunpack.c.h.b16 %v503
        %v734 = vunpack.c.l.b16 %v504
        %v735 = vunpack.c.h.b16 %v504
        %v736 = vunpack.c.l.b16 %v505
        %v737 = vunpack.c.h.b16 %v505
        %v738 = vunpack.c.l.b16 %v506
        %v739 = vunpack.c.h.b16 %v506
        %v740 = vunpack.c.l.b16 %v507
        %v741 = vunpack.c.h.b16 %v507
        %v742 = vunpack.c.l.b16 %v508
        %v743 = vunpack.c.h.b16 %v508
        %v744 = vunpack.c.l.b16 %v509
        %v745 = vunpack.c.h.b16 %v509
        %v746 = vunpack.c.l.b16 %v510
        %v747 = vunpack.c.h.b16 %v510
        %v748 = vunpack.c.l.b16 %v511
        %v749 = vunpack.c.h.b16 %v511
        %v750 = vunpack.c.l.b16 %v512
        %v751 = vunpack.c.h.b16 %v512
        %v752 = vunpack.c.l.b16 %v513
        %v753 = vunpack.c.h.b16 %v513
        %v754 = vpack.c.b16 %v634, %v626
        %v755 = vpack.c.b16 %v635, %v627
        %v756 = vpack.c.b16 %v636, %v628
        %v757 = vpack.c.b16 %v637, %v629
        %v758 = vpack.c.b16 %v638, %v630
        %v759 = vpack.c.b16 %v639, %v631
        %v760 = vpack.c.b16 %v640, %v632
        %v761 = vpack.c.b16 %v641, %v633
        %v762 = vpack.c.b16 %v650, %v642
        %v763 = vpack.c.b16 %v651, %v643
        %v764 = vpack.c.b16 %v652, %v644
        %v765 = vpack.c.b16 %v653, %v645
        %v766 = vpack.c.b16 %v654, %v646
        %v767 = vpack.c.b16 %v655, %v647
        %v768 = vpack.c.b16 %v656, %v648
        %v769 = vpack.c.b16 %v657, %v649
        %v770 = vpack.c.b16 %v666, %v658
        %v771 = vpack.c.b16 %v667, %v659
        %v772 = vpack.c.b16 %v668, %v660
        %v773 = vpack.c.b16 %v669, %v661
        %v774 = vpack.c.b16 %v670, %v662
        %v775 = vpack.c.b16 %v671, %v663
        %v776 = vpack.c.b16 %v672, %v664
        %v777 = vpack.c.b16 %v673, %v665
        %v778 = vpack.c.b16 %v682, %v674
        %v779 = vpack.c.b16 %v683, %v675
        %v780 = vpack.c.b16 %v684, %v676
        %v781 = vpack.c.b16 %v685, %v677
        %v782 = vpack.c.b16 %v686, %v678
        %v783 = vpack.c.b16 %v687, %v679
        %v784 = vpack.c.b16 %v688, %v680
        %v785 = vpack.c.b16 %v689, %v681
        %v786 = vpack.c.b16 %v698, %v690
        %v787 = vpack.c.b16 %v699, %v691
        %v788 = vpack.c.b16 %v700, %v692
        %v789 = vpack.c.b16 %v701, %v693
        %v790 = vpack.c.b16 %v702, %v694
        %v791 = vpack.c.b16 %v703, %v695
        %v792 = vpack.c.b16 %v704, %v696
        %v793 = vpack.c.b16 %v705, %v697
        %v794 = vpack.c.b16 %v714, %v706
        %v795 = vpack.c.b16 %v715, %v707
        %v796 = vpack.c.b16 %v716, %v708
        %v797 = vpack.c.b16 %v717, %v709
        %v798 = vpack.c.b16 %v718, %v710
        %v799 = vpack.c.b16 %v719, %v711
        %v800 = vpack.c.b16 %v720, %v712
        %v801 = vpack.c.b16 %v721, %v713
        %v802 = vpack.c.b16 %v730, %v722
        %v803 = vpack.c.b16 %v731, %v723
        %v804 = vpack.c.b16 %v732, %v724
        %v805 = vpack.c.b16 %v733, %v725
        %v806 = vpack.c.b16 %v734, %v726
        %v807 = vpack.c.b16 %v735, %v727
        %v808 = vpack.c.b16 %v736, %v728
        %v809 = vpack.c.b16 %v737, %v729
        %v810 = vpack.c.b16 %v746, %v738
        %v811 = vpack.c.b16 %v747, %v739
        %v812 = vpack.c.b16 %v748, %v740
        %v813 = vpack.c.b16 %v749, %v741
        %v814 = vpack.c.b16 %v750, %v742
        %v815 = vpack.c.b16 %v751, %v743
        %v816 = vpack.c.b16 %v752, %v744
        %v817 = vpack.c.b16 %v753, %v745
        %882 = vmatprep.subr.bf16.mxu0 %v755
        %883 = vmatpush1.bf16.msra.mxu0 %v754
        %884 = vmatprep.subr.bf16.mxu0 %v763
        %885 = vmatpush1.bf16.msra.mxu0 %v762
        %886 = vmatprep.subr.bf16.mxu0 %v771
        %887 = vmatpush1.bf16.msra.mxu0 %v770
        %888 = vmatprep.subr.bf16.mxu0 %v779
        %889 = vmatpush1.bf16.msra.mxu0 %v778
        %890 = vmatprep.subr.bf16.mxu0 %v787
        %891 = vmatpush1.bf16.msra.mxu0 %v786
        %892 = vmatprep.subr.bf16.mxu0 %v795
        %893 = vmatpush1.bf16.msra.mxu0 %v794
        %894 = vmatprep.subr.bf16.mxu0 %v803
        %895 = vmatpush1.bf16.msra.mxu0 %v802
        %896 = vmatprep.subr.bf16.mxu0 %v811
        %897 = vmatpush1.bf16.msra.mxu0 %v810
        %898 = vmatprep.subr.bf16.mxu0 0
        %899 = vmatpush1.bf16.msra.mxu0 0
        %900 = vmatprep.subr.bf16.mxu0 0
        %901 = vmatpush1.bf16.msra.mxu0 0
        %902 = vmatprep.subr.bf16.mxu0 0
        %903 = vmatpush1.bf16.msra.mxu0 0
        %904 = vmatprep.subr.bf16.mxu0 0
        %905 = vmatpush1.bf16.msra.mxu0 0
        %906 = vmatprep.subr.bf16.mxu0 0
        %907 = vmatpush1.bf16.msra.mxu0 0
        %908 = vmatprep.subr.bf16.mxu0 0
        %909 = vmatpush1.bf16.msra.mxu0 0
        %910 = vmatprep.subr.bf16.mxu0 0
        %911 = vmatpush1.bf16.msra.mxu0 0
        %912 = vmatprep.subr.bf16.mxu0 0
        %913 = vmatpush1.bf16.msra.mxu0 0
        %914 = vmatprep.mubr.bf16.mxu0 0
        %915 = vmatmul.mubr.bf16.gmra.mrb[0].mxu0 %v560
        %v916 = vpop.f32.mrb[0].mxu0
        %v917 = vadd.f32 %v519, %v916
        %v918 = vpop.f32.mrb[0].mxu0
        %v919 = vadd.f32 %v523, %v918
        %v920 = vpop.f32.mrb[0].mxu0
        %v921 = vadd.f32 %v519, %v920
        %v922 = vpop.f32.mrb[0].mxu0
        %v923 = vadd.f32 %v523, %v922
        %924 = vdwg.mxu0
        %925 = vmatprep.subr.bf16.mxu0 %v757
        %926 = vmatpush1.bf16.msra.mxu0 %v756
        %927 = vmatprep.subr.bf16.mxu0 %v765
        %928 = vmatpush1.bf16.msra.mxu0 %v764
        %929 = vmatprep.subr.bf16.mxu0 %v773
        %930 = vmatpush1.bf16.msra.mxu0 %v772
        %931 = vmatprep.subr.bf16.mxu0 %v781
        %932 = vmatpush1.bf16.msra.mxu0 %v780
        %933 = vmatprep.subr.bf16.mxu0 %v789
        %934 = vmatpush1.bf16.msra.mxu0 %v788
        %935 = vmatprep.subr.bf16.mxu0 %v797
        %936 = vmatpush1.bf16.msra.mxu0 %v796
        %937 = vmatprep.subr.bf16.mxu0 %v805
        %938 = vmatpush1.bf16.msra.mxu0 %v804
        %939 = vmatprep.subr.bf16.mxu0 %v813
        %940 = vmatpush1.bf16.msra.mxu0 %v812
        %941 = vmatprep.subr.bf16.mxu0 0
        %942 = vmatpush1.bf16.msra.mxu0 0
        %943 = vmatprep.subr.bf16.mxu0 0
        %944 = vmatpush1.bf16.msra.mxu0 0
        %945 = vmatprep.subr.bf16.mxu0 0
        %946 = vmatpush1.bf16.msra.mxu0 0
        %947 = vmatprep.subr.bf16.mxu0 0
        %948 = vmatpush1.bf16.msra.mxu0 0
        %949 = vmatprep.subr.bf16.mxu0 0
        %950 = vmatpush1.bf16.msra.mxu0 0
        %951 = vmatprep.subr.bf16.mxu0 0
        %952 = vmatpush1.bf16.msra.mxu0 0
        %953 = vmatprep.subr.bf16.mxu0 0
        %954 = vmatpush1.bf16.msra.mxu0 0
        %955 = vmatprep.subr.bf16.mxu0 0
        %956 = vmatpush1.bf16.msra.mxu0 0
        %957 = vmatprep.mubr.bf16.mxu0 0
        %958 = vmatmul.mubr.bf16.gmra.mrb[0].mxu0 %v560
        %v959 = vpop.f32.mrb[0].mxu0
        %v960 = vadd.f32 %v527, %v959
        %v961 = vpop.f32.mrb[0].mxu0
        %v962 = vadd.f32 %v531, %v961
        %v963 = vpop.f32.mrb[0].mxu0
        %v964 = vadd.f32 %v527, %v963
        %v965 = vpop.f32.mrb[0].mxu0
        %v966 = vadd.f32 %v531, %v965
        %967 = vdwg.mxu0
        %968 = vmatprep.subr.bf16.mxu0 %v759
        %969 = vmatpush1.bf16.msra.mxu0 %v758
        %970 = vmatprep.subr.bf16.mxu0 %v767
        %971 = vmatpush1.bf16.msra.mxu0 %v766
        %972 = vmatprep.subr.bf16.mxu0 %v775
        %973 = vmatpush1.bf16.msra.mxu0 %v774
        %974 = vmatprep.subr.bf16.mxu0 %v783
        %975 = vmatpush1.bf16.msra.mxu0 %v782
        %976 = vmatprep.subr.bf16.mxu0 %v791
        %977 = vmatpush1.bf16.msra.mxu0 %v790
        %978 = vmatprep.subr.bf16.mxu0 %v799
        %979 = vmatpush1.bf16.msra.mxu0 %v798
        %980 = vmatprep.subr.bf16.mxu0 %v807
        %981 = vmatpush1.bf16.msra.mxu0 %v806
        %982 = vmatprep.subr.bf16.mxu0 %v815
        %983 = vmatpush1.bf16.msra.mxu0 %v814
        %984 = vmatprep.subr.bf16.mxu0 0
        %985 = vmatpush1.bf16.msra.mxu0 0
        %986 = vmatprep.subr.bf16.mxu0 0
        %987 = vmatpush1.bf16.msra.mxu0 0
        %988 = vmatprep.subr.bf16.mxu0 0
        %989 = vmatpush1.bf16.msra.mxu0 0
        %990 = vmatprep.subr.bf16.mxu0 0
        %991 = vmatpush1.bf16.msra.mxu0 0
        %992 = vmatprep.subr.bf16.mxu0 0
        %993 = vmatpush1.bf16.msra.mxu0 0
        %994 = vmatprep.subr.bf16.mxu0 0
        %995 = vmatpush1.bf16.msra.mxu0 0
        %996 = vmatprep.subr.bf16.mxu0 0
        %997 = vmatpush1.bf16.msra.mxu0 0
        %998 = vmatprep.subr.bf16.mxu0 0
        %999 = vmatpush1.bf16.msra.mxu0 0
        %1000 = vmatprep.mubr.bf16.mxu0 0
        %1001 = vmatmul.mubr.bf16.gmra.mrb[0].mxu0 %v560
        %v1002 = vpop.f32.mrb[0].mxu0
        %v1003 = vadd.f32 %v535, %v1002
        %v1004 = vpop.f32.mrb[0].mxu0
        %v1005 = vadd.f32 %v539, %v1004
        %v1006 = vpop.f32.mrb[0].mxu0
        %v1007 = vadd.f32 %v535, %v1006
        %v1008 = vpop.f32.mrb[0].mxu0
        %v1009 = vadd.f32 %v539, %v1008
        %1010 = vdwg.mxu0
        %1011 = vmatprep.subr.bf16.mxu0 %v761
        %1012 = vmatpush1.bf16.msra.mxu0 %v760
        %1013 = vmatprep.subr.bf16.mxu0 %v769
        %1014 = vmatpush1.bf16.msra.mxu0 %v768
        %1015 = vmatprep.subr.bf16.mxu0 %v777
        %1016 = vmatpush1.bf16.msra.mxu0 %v776
        %1017 = vmatprep.subr.bf16.mxu0 %v785
        %1018 = vmatpush1.bf16.msra.mxu0 %v784
        %1019 = vmatprep.subr.bf16.mxu0 %v793
        %1020 = vmatpush1.bf16.msra.mxu0 %v792
        %1021 = vmatprep.subr.bf16.mxu0 %v801
        %1022 = vmatpush1.bf16.msra.mxu0 %v800
        %1023 = vmatprep.subr.bf16.mxu0 %v809
        %1024 = vmatpush1.bf16.msra.mxu0 %v808
        %1025 = vmatprep.subr.bf16.mxu0 %v817
        %1026 = vmatpush1.bf16.msra.mxu0 %v816
        %1027 = vmatprep.subr.bf16.mxu0 0
        %1028 = vmatpush1.bf16.msra.mxu0 0
        %1029 = vmatprep.subr.bf16.mxu0 0
        %1030 = vmatpush1.bf16.msra.mxu0 0
        %1031 = vmatprep.subr.bf16.mxu0 0
        %1032 = vmatpush1.bf16.msra.mxu0 0
        %1033 = vmatprep.subr.bf16.mxu0 0
        %1034 = vmatpush1.bf16.msra.mxu0 0
        %1035 = vmatprep.subr.bf16.mxu0 0
        %1036 = vmatpush1.bf16.msra.mxu0 0
        %1037 = vmatprep.subr.bf16.mxu0 0
        %1038 = vmatpush1.bf16.msra.mxu0 0
        %1039 = vmatprep.subr.bf16.mxu0 0
        %1040 = vmatpush1.bf16.msra.mxu0 0
        %1041 = vmatprep.subr.bf16.mxu0 0
        %1042 = vmatpush1.bf16.msra.mxu0 0
        %1043 = vmatprep.mubr.bf16.mxu0 0
        %1044 = vmatmul.mubr.bf16.gmra.mrb[0].mxu0 %v560
        %v1045 = vpop.f32.mrb[0].mxu0
        %v1046 = vadd.f32 %v543, %v1045
        %v1047 = vpop.f32.mrb[0].mxu0
        %v1048 = vadd.f32 %v547, %v1047
        %v1049 = vpop.f32.mrb[0].mxu0
        %v1050 = vadd.f32 %v543, %v1049
        %v1051 = vpop.f32.mrb[0].mxu0
        %v1052 = vadd.f32 %v547, %v1051
        %1053 = vdwg.mxu0
        %v1054 = vmax.f32 %v917, 0.0
        %v1055 = vmax.f32 %v919, 0.0
        %v1056 = vmax.f32 %v960, 0.0
        %v1057 = vmax.f32 %v962, 0.0
        %v1058 = vmax.f32 %v1003, 0.0
        %v1059 = vmax.f32 %v1005, 0.0
        %v1060 = vmax.f32 %v1046, 0.0
        %v1061 = vmax.f32 %v1048, 0.0
        %v1062 = vmax.f32 %v921, 0.0
        %v1063 = vmax.f32 %v923, 0.0
        %v1064 = vmax.f32 %v964, 0.0
        %v1065 = vmax.f32 %v966, 0.0
        %v1066 = vmax.f32 %v1007, 0.0
        %v1067 = vmax.f32 %v1009, 0.0
        %v1068 = vmax.f32 %v1050, 0.0
        %v1069 = vmax.f32 %v1052, 0.0
        %v1070 = vpack.c.bf16 %v1062, %v1054
        %v1071 = vpack.c.bf16 %v1063, %v1055
        %v1072 = vpack.c.bf16 %v1064, %v1056
        %v1073 = vpack.c.bf16 %v1065, %v1057
        %v1074 = vpack.c.bf16 %v1066, %v1058
        %v1075 = vpack.c.bf16 %v1067, %v1059
        %v1076 = vpack.c.bf16 %v1068, %v1060
        %v1077 = vpack.c.bf16 %v1069, %v1061
        %v1078 = vld [vmem:[#allocation9] sm:$0xff]
        %v1079 = vld [vmem:[#allocation9 + $0x8] sm:$0xff]
        %v1080 = vld [vmem:[#allocation9 + $0x10] sm:$0xff]
        %v1081 = vld [vmem:[#allocation9 + $0x18] sm:$0xff]
        %v1082 = vld [vmem:[#allocation9 + $0x20] sm:$0xff]
        %v1083 = vld [vmem:[#allocation9 + $0x28] sm:$0xff]
        %v1084 = vld [vmem:[#allocation9 + $0x30] sm:$0xff]
        %v1085 = vld [vmem:[#allocation9 + $0x38] sm:$0xff]
        %v1086 = vld [vmem:[#allocation9 + $0x40] sm:$0xff]
        %v1087 = vld [vmem:[#allocation9 + $0x48] sm:$0xff]
        %v1088 = vld [vmem:[#allocation9 + $0x50] sm:$0xff]
        %v1089 = vld [vmem:[#allocation9 + $0x58] sm:$0xff]
        %v1090 = vld [vmem:[#allocation9 + $0x60] sm:$0xff]
        %v1091 = vld [vmem:[#allocation9 + $0x68] sm:$0xff]
        %v1092 = vld [vmem:[#allocation9 + $0x70] sm:$0xff]
        %v1093 = vld [vmem:[#allocation9 + $0x78] sm:$0xff]
        %v1094 = vld [vmem:[#allocation9 + $0x80] sm:$0xff]
        %v1095 = vld [vmem:[#allocation9 + $0x88] sm:$0xff]
        %v1096 = vld [vmem:[#allocation9 + $0x90] sm:$0xff]
        %v1097 = vld [vmem:[#allocation9 + $0x98] sm:$0xff]
        %v1098 = vld [vmem:[#allocation9 + $0xa0] sm:$0xff]
        %v1099 = vld [vmem:[#allocation9 + $0xa8] sm:$0xff]
        %v1100 = vld [vmem:[#allocation9 + $0xb0] sm:$0xff]
        %v1101 = vld [vmem:[#allocation9 + $0xb8] sm:$0xff]
        %v1102 = vld [vmem:[#allocation9 + $0xc0] sm:$0xff]
        %v1103 = vld [vmem:[#allocation9 + $0xc8] sm:$0xff]
        %v1104 = vld [vmem:[#allocation9 + $0xd0] sm:$0xff]
        %v1105 = vld [vmem:[#allocation9 + $0xd8] sm:$0xff]
        %v1106 = vld [vmem:[#allocation9 + $0xe0] sm:$0xff]
        %v1107 = vld [vmem:[#allocation9 + $0xe8] sm:$0xff]
        %v1108 = vld [vmem:[#allocation9 + $0xf0] sm:$0xff]
        %v1109 = vld [vmem:[#allocation9 + $0xf8] sm:$0xff]
        %v1110 = vld [vmem:[#allocation9 + $0x100] sm:$0xff]
        %v1111 = vld [vmem:[#allocation9 + $0x108] sm:$0xff]
        %v1112 = vld [vmem:[#allocation9 + $0x110] sm:$0xff]
        %v1113 = vld [vmem:[#allocation9 + $0x118] sm:$0xff]
        %v1114 = vld [vmem:[#allocation9 + $0x120] sm:$0xff]
        %v1115 = vld [vmem:[#allocation9 + $0x128] sm:$0xff]
        %v1116 = vld [vmem:[#allocation9 + $0x130] sm:$0xff]
        %v1117 = vld [vmem:[#allocation9 + $0x138] sm:$0xff]
        %v1118 = vld [vmem:[#allocation9 + $0x140] sm:$0xff]
        %v1119 = vld [vmem:[#allocation9 + $0x148] sm:$0xff]
        %v1120 = vld [vmem:[#allocation9 + $0x150] sm:$0xff]
        %v1121 = vld [vmem:[#allocation9 + $0x158] sm:$0xff]
        %v1122 = vld [vmem:[#allocation9 + $0x160] sm:$0xff]
        %v1123 = vld [vmem:[#allocation9 + $0x168] sm:$0xff]
        %v1124 = vld [vmem:[#allocation9 + $0x170] sm:$0xff]
        %v1125 = vld [vmem:[#allocation9 + $0x178] sm:$0xff]
        %v1126 = vld [vmem:[#allocation9 + $0x180] sm:$0xff]
        %v1127 = vld [vmem:[#allocation9 + $0x188] sm:$0xff]
        %v1128 = vld [vmem:[#allocation9 + $0x190] sm:$0xff]
        %v1129 = vld [vmem:[#allocation9 + $0x198] sm:$0xff]
        %v1130 = vld [vmem:[#allocation9 + $0x1a0] sm:$0xff]
        %v1131 = vld [vmem:[#allocation9 + $0x1a8] sm:$0xff]
        %v1132 = vld [vmem:[#allocation9 + $0x1b0] sm:$0xff]
        %v1133 = vld [vmem:[#allocation9 + $0x1b8] sm:$0xff]
        %v1134 = vld [vmem:[#allocation9 + $0x1c0] sm:$0xff]
        %v1135 = vld [vmem:[#allocation9 + $0x1c8] sm:$0xff]
        %v1136 = vld [vmem:[#allocation9 + $0x1d0] sm:$0xff]
        %v1137 = vld [vmem:[#allocation9 + $0x1d8] sm:$0xff]
        %v1138 = vld [vmem:[#allocation9 + $0x1e0] sm:$0xff]
        %v1139 = vld [vmem:[#allocation9 + $0x1e8] sm:$0xff]
        %v1140 = vld [vmem:[#allocation9 + $0x1f0] sm:$0xff]
        %v1141 = vld [vmem:[#allocation9 + $0x1f8] sm:$0xff]
        %v1142 = vld [vmem:[#allocation9 + $0x200] sm:$0xff]
        %v1143 = vld [vmem:[#allocation9 + $0x208] sm:$0xff]
        %v1144 = vld [vmem:[#allocation9 + $0x210] sm:$0xff]
        %v1145 = vld [vmem:[#allocation9 + $0x218] sm:$0xff]
        %v1146 = vld [vmem:[#allocation9 + $0x220] sm:$0xff]
        %v1147 = vld [vmem:[#allocation9 + $0x228] sm:$0xff]
        %v1148 = vld [vmem:[#allocation9 + $0x230] sm:$0xff]
        %v1149 = vld [vmem:[#allocation9 + $0x238] sm:$0xff]
        %v1150 = vld [vmem:[#allocation9 + $0x240] sm:$0xff]
        %v1151 = vld [vmem:[#allocation9 + $0x248] sm:$0xff]
        %v1152 = vld [vmem:[#allocation9 + $0x250] sm:$0xff]
        %v1153 = vld [vmem:[#allocation9 + $0x258] sm:$0xff]
        %v1154 = vld [vmem:[#allocation9 + $0x260] sm:$0xff]
        %v1155 = vld [vmem:[#allocation9 + $0x268] sm:$0xff]
        %v1156 = vld [vmem:[#allocation9 + $0x270] sm:$0xff]
        %v1157 = vld [vmem:[#allocation9 + $0x278] sm:$0xff]
        %v1158 = vld [vmem:[#allocation9 + $0x280] sm:$0xff]
        %v1159 = vld [vmem:[#allocation9 + $0x288] sm:$0xff]
        %v1160 = vld [vmem:[#allocation9 + $0x290] sm:$0xff]
        %v1161 = vld [vmem:[#allocation9 + $0x298] sm:$0xff]
        %v1162 = vld [vmem:[#allocation9 + $0x2a0] sm:$0xff]
        %v1163 = vld [vmem:[#allocation9 + $0x2a8] sm:$0xff]
        %v1164 = vld [vmem:[#allocation9 + $0x2b0] sm:$0xff]
        %v1165 = vld [vmem:[#allocation9 + $0x2b8] sm:$0xff]
        %v1166 = vld [vmem:[#allocation9 + $0x2c0] sm:$0xff]
        %v1167 = vld [vmem:[#allocation9 + $0x2c8] sm:$0xff]
        %v1168 = vld [vmem:[#allocation9 + $0x2d0] sm:$0xff]
        %v1169 = vld [vmem:[#allocation9 + $0x2d8] sm:$0xff]
        %v1170 = vld [vmem:[#allocation9 + $0x2e0] sm:$0xff]
        %v1171 = vld [vmem:[#allocation9 + $0x2e8] sm:$0xff]
        %v1172 = vld [vmem:[#allocation9 + $0x2f0] sm:$0xff]
        %v1173 = vld [vmem:[#allocation9 + $0x2f8] sm:$0xff]
        %v1174 = vld [vmem:[#allocation9 + $0x300] sm:$0xff]
        %v1175 = vld [vmem:[#allocation9 + $0x308] sm:$0xff]
        %v1176 = vld [vmem:[#allocation9 + $0x310] sm:$0xff]
        %v1177 = vld [vmem:[#allocation9 + $0x318] sm:$0xff]
        %v1178 = vld [vmem:[#allocation9 + $0x320] sm:$0xff]
        %v1179 = vld [vmem:[#allocation9 + $0x328] sm:$0xff]
        %v1180 = vld [vmem:[#allocation9 + $0x330] sm:$0xff]
        %v1181 = vld [vmem:[#allocation9 + $0x338] sm:$0xff]
        %v1182 = vld [vmem:[#allocation9 + $0x340] sm:$0xff]
        %v1183 = vld [vmem:[#allocation9 + $0x348] sm:$0xff]
        %v1184 = vld [vmem:[#allocation9 + $0x350] sm:$0xff]
        %v1185 = vld [vmem:[#allocation9 + $0x358] sm:$0xff]
        %v1186 = vld [vmem:[#allocation9 + $0x360] sm:$0xff]
        %v1187 = vld [vmem:[#allocation9 + $0x368] sm:$0xff]
        %v1188 = vld [vmem:[#allocation9 + $0x370] sm:$0xff]
        %v1189 = vld [vmem:[#allocation9 + $0x378] sm:$0xff]
        %v1190 = vld [vmem:[#allocation9 + $0x380] sm:$0xff]
        %v1191 = vld [vmem:[#allocation9 + $0x388] sm:$0xff]
        %v1192 = vld [vmem:[#allocation9 + $0x390] sm:$0xff]
        %v1193 = vld [vmem:[#allocation9 + $0x398] sm:$0xff]
        %v1194 = vld [vmem:[#allocation9 + $0x3a0] sm:$0xff]
        %v1195 = vld [vmem:[#allocation9 + $0x3a8] sm:$0xff]
        %v1196 = vld [vmem:[#allocation9 + $0x3b0] sm:$0xff]
        %v1197 = vld [vmem:[#allocation9 + $0x3b8] sm:$0xff]
        %v1198 = vld [vmem:[#allocation9 + $0x3c0] sm:$0xff]
        %v1199 = vld [vmem:[#allocation9 + $0x3c8] sm:$0xff]
        %v1200 = vld [vmem:[#allocation9 + $0x3d0] sm:$0xff]
        %v1201 = vld [vmem:[#allocation9 + $0x3d8] sm:$0xff]
        %v1202 = vld [vmem:[#allocation9 + $0x3e0] sm:$0xff]
        %v1203 = vld [vmem:[#allocation9 + $0x3e8] sm:$0xff]
        %v1204 = vld [vmem:[#allocation9 + $0x3f0] sm:$0xff]
        %v1205 = vld [vmem:[#allocation9 + $0x3f8] sm:$0xff]
        %v1206 = vld [vmem:[%s4] sm:$0x3]
        %v1208 = vlaneseq
        %v1209 = vshrl.u32 %v1208, 7
        %v1210 = vsub.s32 0, %v1209
        %v1211 = vrot.slane %v1206, %v1210
        %v1212 = vlaneseq
        %v1213 = vshrl.u32 %v1212, 7
        %v1214 = vsub.s32 1, %v1213
        %v1215 = vrot.slane %v1206, %v1214
        %v1346 = vunpack.c.l.b16 %v1078
        %v1347 = vunpack.c.h.b16 %v1078
        %v1348 = vunpack.c.l.b16 %v1079
        %v1349 = vunpack.c.h.b16 %v1079
        %v1350 = vunpack.c.l.b16 %v1080
        %v1351 = vunpack.c.h.b16 %v1080
        %v1352 = vunpack.c.l.b16 %v1081
        %v1353 = vunpack.c.h.b16 %v1081
        %v1354 = vunpack.c.l.b16 %v1082
        %v1355 = vunpack.c.h.b16 %v1082
        %v1356 = vunpack.c.l.b16 %v1083
        %v1357 = vunpack.c.h.b16 %v1083
        %v1358 = vunpack.c.l.b16 %v1084
        %v1359 = vunpack.c.h.b16 %v1084
        %v1360 = vunpack.c.l.b16 %v1085
        %v1361 = vunpack.c.h.b16 %v1085
        %v1362 = vunpack.c.l.b16 %v1086
        %v1363 = vunpack.c.h.b16 %v1086
        %v1364 = vunpack.c.l.b16 %v1087
        %v1365 = vunpack.c.h.b16 %v1087
        %v1366 = vunpack.c.l.b16 %v1088
        %v1367 = vunpack.c.h.b16 %v1088
        %v1368 = vunpack.c.l.b16 %v1089
        %v1369 = vunpack.c.h.b16 %v1089
        %v1370 = vunpack.c.l.b16 %v1090
        %v1371 = vunpack.c.h.b16 %v1090
        %v1372 = vunpack.c.l.b16 %v1091
        %v1373 = vunpack.c.h.b16 %v1091
        %v1374 = vunpack.c.l.b16 %v1092
        %v1375 = vunpack.c.h.b16 %v1092
        %v1376 = vunpack.c.l.b16 %v1093
        %v1377 = vunpack.c.h.b16 %v1093
        %v1378 = vunpack.c.l.b16 %v1094
        %v1379 = vunpack.c.h.b16 %v1094
        %v1380 = vunpack.c.l.b16 %v1095
        %v1381 = vunpack.c.h.b16 %v1095
        %v1382 = vunpack.c.l.b16 %v1096
        %v1383 = vunpack.c.h.b16 %v1096
        %v1384 = vunpack.c.l.b16 %v1097
        %v1385 = vunpack.c.h.b16 %v1097
        %v1386 = vunpack.c.l.b16 %v1098
        %v1387 = vunpack.c.h.b16 %v1098
        %v1388 = vunpack.c.l.b16 %v1099
        %v1389 = vunpack.c.h.b16 %v1099
        %v1390 = vunpack.c.l.b16 %v1100
        %v1391 = vunpack.c.h.b16 %v1100
        %v1392 = vunpack.c.l.b16 %v1101
        %v1393 = vunpack.c.h.b16 %v1101
        %v1394 = vunpack.c.l.b16 %v1102
        %v1395 = vunpack.c.h.b16 %v1102
        %v1396 = vunpack.c.l.b16 %v1103
        %v1397 = vunpack.c.h.b16 %v1103
        %v1398 = vunpack.c.l.b16 %v1104
        %v1399 = vunpack.c.h.b16 %v1104
        %v1400 = vunpack.c.l.b16 %v1105
        %v1401 = vunpack.c.h.b16 %v1105
        %v1402 = vunpack.c.l.b16 %v1106
        %v1403 = vunpack.c.h.b16 %v1106
        %v1404 = vunpack.c.l.b16 %v1107
        %v1405 = vunpack.c.h.b16 %v1107
        %v1406 = vunpack.c.l.b16 %v1108
        %v1407 = vunpack.c.h.b16 %v1108
        %v1408 = vunpack.c.l.b16 %v1109
        %v1409 = vunpack.c.h.b16 %v1109
        %v1410 = vunpack.c.l.b16 %v1110
        %v1411 = vunpack.c.h.b16 %v1110
        %v1412 = vunpack.c.l.b16 %v1111
        %v1413 = vunpack.c.h.b16 %v1111
        %v1414 = vunpack.c.l.b16 %v1112
        %v1415 = vunpack.c.h.b16 %v1112
        %v1416 = vunpack.c.l.b16 %v1113
        %v1417 = vunpack.c.h.b16 %v1113
        %v1418 = vunpack.c.l.b16 %v1114
        %v1419 = vunpack.c.h.b16 %v1114
        %v1420 = vunpack.c.l.b16 %v1115
        %v1421 = vunpack.c.h.b16 %v1115
        %v1422 = vunpack.c.l.b16 %v1116
        %v1423 = vunpack.c.h.b16 %v1116
        %v1424 = vunpack.c.l.b16 %v1117
        %v1425 = vunpack.c.h.b16 %v1117
        %v1426 = vunpack.c.l.b16 %v1118
        %v1427 = vunpack.c.h.b16 %v1118
        %v1428 = vunpack.c.l.b16 %v1119
        %v1429 = vunpack.c.h.b16 %v1119
        %v1430 = vunpack.c.l.b16 %v1120
        %v1431 = vunpack.c.h.b16 %v1120
        %v1432 = vunpack.c.l.b16 %v1121
        %v1433 = vunpack.c.h.b16 %v1121
        %v1434 = vunpack.c.l.b16 %v1122
        %v1435 = vunpack.c.h.b16 %v1122
        %v1436 = vunpack.c.l.b16 %v1123
        %v1437 = vunpack.c.h.b16 %v1123
        %v1438 = vunpack.c.l.b16 %v1124
        %v1439 = vunpack.c.h.b16 %v1124
        %v1440 = vunpack.c.l.b16 %v1125
        %v1441 = vunpack.c.h.b16 %v1125
        %v1442 = vunpack.c.l.b16 %v1126
        %v1443 = vunpack.c.h.b16 %v1126
        %v1444 = vunpack.c.l.b16 %v1127
        %v1445 = vunpack.c.h.b16 %v1127
        %v1446 = vunpack.c.l.b16 %v1128
        %v1447 = vunpack.c.h.b16 %v1128
        %v1448 = vunpack.c.l.b16 %v1129
        %v1449 = vunpack.c.h.b16 %v1129
        %v1450 = vunpack.c.l.b16 %v1130
        %v1451 = vunpack.c.h.b16 %v1130
        %v1452 = vunpack.c.l.b16 %v1131
        %v1453 = vunpack.c.h.b16 %v1131
        %v1454 = vunpack.c.l.b16 %v1132
        %v1455 = vunpack.c.h.b16 %v1132
        %v1456 = vunpack.c.l.b16 %v1133
        %v1457 = vunpack.c.h.b16 %v1133
        %v1458 = vunpack.c.l.b16 %v1134
        %v1459 = vunpack.c.h.b16 %v1134
        %v1460 = vunpack.c.l.b16 %v1135
        %v1461 = vunpack.c.h.b16 %v1135
        %v1462 = vunpack.c.l.b16 %v1136
        %v1463 = vunpack.c.h.b16 %v1136
        %v1464 = vunpack.c.l.b16 %v1137
        %v1465 = vunpack.c.h.b16 %v1137
        %v1466 = vunpack.c.l.b16 %v1138
        %v1467 = vunpack.c.h.b16 %v1138
        %v1468 = vunpack.c.l.b16 %v1139
        %v1469 = vunpack.c.h.b16 %v1139
        %v1470 = vunpack.c.l.b16 %v1140
        %v1471 = vunpack.c.h.b16 %v1140
        %v1472 = vunpack.c.l.b16 %v1141
        %v1473 = vunpack.c.h.b16 %v1141
        %v1474 = vunpack.c.l.b16 %v1142
        %v1475 = vunpack.c.h.b16 %v1142
        %v1476 = vunpack.c.l.b16 %v1143
        %v1477 = vunpack.c.h.b16 %v1143
        %v1478 = vunpack.c.l.b16 %v1144
        %v1479 = vunpack.c.h.b16 %v1144
        %v1480 = vunpack.c.l.b16 %v1145
        %v1481 = vunpack.c.h.b16 %v1145
        %v1482 = vunpack.c.l.b16 %v1146
        %v1483 = vunpack.c.h.b16 %v1146
        %v1484 = vunpack.c.l.b16 %v1147
        %v1485 = vunpack.c.h.b16 %v1147
        %v1486 = vunpack.c.l.b16 %v1148
        %v1487 = vunpack.c.h.b16 %v1148
        %v1488 = vunpack.c.l.b16 %v1149
        %v1489 = vunpack.c.h.b16 %v1149
        %v1490 = vunpack.c.l.b16 %v1150
        %v1491 = vunpack.c.h.b16 %v1150
        %v1492 = vunpack.c.l.b16 %v1151
        %v1493 = vunpack.c.h.b16 %v1151
        %v1494 = vunpack.c.l.b16 %v1152
        %v1495 = vunpack.c.h.b16 %v1152
        %v1496 = vunpack.c.l.b16 %v1153
        %v1497 = vunpack.c.h.b16 %v1153
        %v1498 = vunpack.c.l.b16 %v1154
        %v1499 = vunpack.c.h.b16 %v1154
        %v1500 = vunpack.c.l.b16 %v1155
        %v1501 = vunpack.c.h.b16 %v1155
        %v1502 = vunpack.c.l.b16 %v1156
        %v1503 = vunpack.c.h.b16 %v1156
        %v1504 = vunpack.c.l.b16 %v1157
        %v1505 = vunpack.c.h.b16 %v1157
        %v1506 = vunpack.c.l.b16 %v1158
        %v1507 = vunpack.c.h.b16 %v1158
        %v1508 = vunpack.c.l.b16 %v1159
        %v1509 = vunpack.c.h.b16 %v1159
        %v1510 = vunpack.c.l.b16 %v1160
        %v1511 = vunpack.c.h.b16 %v1160
        %v1512 = vunpack.c.l.b16 %v1161
        %v1513 = vunpack.c.h.b16 %v1161
        %v1514 = vunpack.c.l.b16 %v1162
        %v1515 = vunpack.c.h.b16 %v1162
        %v1516 = vunpack.c.l.b16 %v1163
        %v1517 = vunpack.c.h.b16 %v1163
        %v1518 = vunpack.c.l.b16 %v1164
        %v1519 = vunpack.c.h.b16 %v1164
        %v1520 = vunpack.c.l.b16 %v1165
        %v1521 = vunpack.c.h.b16 %v1165
        %v1522 = vunpack.c.l.b16 %v1166
        %v1523 = vunpack.c.h.b16 %v1166
        %v1524 = vunpack.c.l.b16 %v1167
        %v1525 = vunpack.c.h.b16 %v1167
        %v1526 = vunpack.c.l.b16 %v1168
        %v1527 = vunpack.c.h.b16 %v1168
        %v1528 = vunpack.c.l.b16 %v1169
        %v1529 = vunpack.c.h.b16 %v1169
        %v1530 = vunpack.c.l.b16 %v1170
        %v1531 = vunpack.c.h.b16 %v1170
        %v1532 = vunpack.c.l.b16 %v1171
        %v1533 = vunpack.c.h.b16 %v1171
        %v1534 = vunpack.c.l.b16 %v1172
        %v1535 = vunpack.c.h.b16 %v1172
        %v1536 = vunpack.c.l.b16 %v1173
        %v1537 = vunpack.c.h.b16 %v1173
        %v1538 = vunpack.c.l.b16 %v1174
        %v1539 = vunpack.c.h.b16 %v1174
        %v1540 = vunpack.c.l.b16 %v1175
        %v1541 = vunpack.c.h.b16 %v1175
        %v1542 = vunpack.c.l.b16 %v1176
        %v1543 = vunpack.c.h.b16 %v1176
        %v1544 = vunpack.c.l.b16 %v1177
        %v1545 = vunpack.c.h.b16 %v1177
        %v1546 = vunpack.c.l.b16 %v1178
        %v1547 = vunpack.c.h.b16 %v1178
        %v1548 = vunpack.c.l.b16 %v1179
        %v1549 = vunpack.c.h.b16 %v1179
        %v1550 = vunpack.c.l.b16 %v1180
        %v1551 = vunpack.c.h.b16 %v1180
        %v1552 = vunpack.c.l.b16 %v1181
        %v1553 = vunpack.c.h.b16 %v1181
        %v1554 = vunpack.c.l.b16 %v1182
        %v1555 = vunpack.c.h.b16 %v1182
        %v1556 = vunpack.c.l.b16 %v1183
        %v1557 = vunpack.c.h.b16 %v1183
        %v1558 = vunpack.c.l.b16 %v1184
        %v1559 = vunpack.c.h.b16 %v1184
        %v1560 = vunpack.c.l.b16 %v1185
        %v1561 = vunpack.c.h.b16 %v1185
        %v1562 = vunpack.c.l.b16 %v1186
        %v1563 = vunpack.c.h.b16 %v1186
        %v1564 = vunpack.c.l.b16 %v1187
        %v1565 = vunpack.c.h.b16 %v1187
        %v1566 = vunpack.c.l.b16 %v1188
        %v1567 = vunpack.c.h.b16 %v1188
        %v1568 = vunpack.c.l.b16 %v1189
        %v1569 = vunpack.c.h.b16 %v1189
        %v1570 = vunpack.c.l.b16 %v1190
        %v1571 = vunpack.c.h.b16 %v1190
        %v1572 = vunpack.c.l.b16 %v1191
        %v1573 = vunpack.c.h.b16 %v1191
        %v1574 = vunpack.c.l.b16 %v1192
        %v1575 = vunpack.c.h.b16 %v1192
        %v1576 = vunpack.c.l.b16 %v1193
        %v1577 = vunpack.c.h.b16 %v1193
        %v1578 = vunpack.c.l.b16 %v1194
        %v1579 = vunpack.c.h.b16 %v1194
        %v1580 = vunpack.c.l.b16 %v1195
        %v1581 = vunpack.c.h.b16 %v1195
        %v1582 = vunpack.c.l.b16 %v1196
        %v1583 = vunpack.c.h.b16 %v1196
        %v1584 = vunpack.c.l.b16 %v1197
        %v1585 = vunpack.c.h.b16 %v1197
        %v1586 = vunpack.c.l.b16 %v1198
        %v1587 = vunpack.c.h.b16 %v1198
        %v1588 = vunpack.c.l.b16 %v1199
        %v1589 = vunpack.c.h.b16 %v1199
        %v1590 = vunpack.c.l.b16 %v1200
        %v1591 = vunpack.c.h.b16 %v1200
        %v1592 = vunpack.c.l.b16 %v1201
        %v1593 = vunpack.c.h.b16 %v1201
        %v1594 = vunpack.c.l.b16 %v1202
        %v1595 = vunpack.c.h.b16 %v1202
        %v1596 = vunpack.c.l.b16 %v1203
        %v1597 = vunpack.c.h.b16 %v1203
        %v1598 = vunpack.c.l.b16 %v1204
        %v1599 = vunpack.c.h.b16 %v1204
        %v1600 = vunpack.c.l.b16 %v1205
        %v1601 = vunpack.c.h.b16 %v1205
        %v1602 = vpack.c.b16 %v1348, %v1346
        %v1603 = vpack.c.b16 %v1349, %v1347
        %v1604 = vpack.c.b16 %v1352, %v1350
        %v1605 = vpack.c.b16 %v1353, %v1351
        %v1606 = vpack.c.b16 %v1356, %v1354
        %v1607 = vpack.c.b16 %v1357, %v1355
        %v1608 = vpack.c.b16 %v1360, %v1358
        %v1609 = vpack.c.b16 %v1361, %v1359
        %v1610 = vpack.c.b16 %v1364, %v1362
        %v1611 = vpack.c.b16 %v1365, %v1363
        %v1612 = vpack.c.b16 %v1368, %v1366
        %v1613 = vpack.c.b16 %v1369, %v1367
        %v1614 = vpack.c.b16 %v1372, %v1370
        %v1615 = vpack.c.b16 %v1373, %v1371
        %v1616 = vpack.c.b16 %v1376, %v1374
        %v1617 = vpack.c.b16 %v1377, %v1375
        %v1618 = vpack.c.b16 %v1380, %v1378
        %v1619 = vpack.c.b16 %v1381, %v1379
        %v1620 = vpack.c.b16 %v1384, %v1382
        %v1621 = vpack.c.b16 %v1385, %v1383
        %v1622 = vpack.c.b16 %v1388, %v1386
        %v1623 = vpack.c.b16 %v1389, %v1387
        %v1624 = vpack.c.b16 %v1392, %v1390
        %v1625 = vpack.c.b16 %v1393, %v1391
        %v1626 = vpack.c.b16 %v1396, %v1394
        %v1627 = vpack.c.b16 %v1397, %v1395
        %v1628 = vpack.c.b16 %v1400, %v1398
        %v1629 = vpack.c.b16 %v1401, %v1399
        %v1630 = vpack.c.b16 %v1404, %v1402
        %v1631 = vpack.c.b16 %v1405, %v1403
        %v1632 = vpack.c.b16 %v1408, %v1406
        %v1633 = vpack.c.b16 %v1409, %v1407
        %v1634 = vpack.c.b16 %v1412, %v1410
        %v1635 = vpack.c.b16 %v1413, %v1411
        %v1636 = vpack.c.b16 %v1416, %v1414
        %v1637 = vpack.c.b16 %v1417, %v1415
        %v1638 = vpack.c.b16 %v1420, %v1418
        %v1639 = vpack.c.b16 %v1421, %v1419
        %v1640 = vpack.c.b16 %v1424, %v1422
        %v1641 = vpack.c.b16 %v1425, %v1423
        %v1642 = vpack.c.b16 %v1428, %v1426
        %v1643 = vpack.c.b16 %v1429, %v1427
        %v1644 = vpack.c.b16 %v1432, %v1430
        %v1645 = vpack.c.b16 %v1433, %v1431
        %v1646 = vpack.c.b16 %v1436, %v1434
        %v1647 = vpack.c.b16 %v1437, %v1435
        %v1648 = vpack.c.b16 %v1440, %v1438
        %v1649 = vpack.c.b16 %v1441, %v1439
        %v1650 = vpack.c.b16 %v1444, %v1442
        %v1651 = vpack.c.b16 %v1445, %v1443
        %v1652 = vpack.c.b16 %v1448, %v1446
        %v1653 = vpack.c.b16 %v1449, %v1447
        %v1654 = vpack.c.b16 %v1452, %v1450
        %v1655 = vpack.c.b16 %v1453, %v1451
        %v1656 = vpack.c.b16 %v1456, %v1454
        %v1657 = vpack.c.b16 %v1457, %v1455
        %v1658 = vpack.c.b16 %v1460, %v1458
        %v1659 = vpack.c.b16 %v1461, %v1459
        %v1660 = vpack.c.b16 %v1464, %v1462
        %v1661 = vpack.c.b16 %v1465, %v1463
        %v1662 = vpack.c.b16 %v1468, %v1466
        %v1663 = vpack.c.b16 %v1469, %v1467
        %v1664 = vpack.c.b16 %v1472, %v1470
        %v1665 = vpack.c.b16 %v1473, %v1471
        %v1666 = vpack.c.b16 %v1476, %v1474
        %v1667 = vpack.c.b16 %v1477, %v1475
        %v1668 = vpack.c.b16 %v1480, %v1478
        %v1669 = vpack.c.b16 %v1481, %v1479
        %v1670 = vpack.c.b16 %v1484, %v1482
        %v1671 = vpack.c.b16 %v1485, %v1483
        %v1672 = vpack.c.b16 %v1488, %v1486
        %v1673 = vpack.c.b16 %v1489, %v1487
        %v1674 = vpack.c.b16 %v1492, %v1490
        %v1675 = vpack.c.b16 %v1493, %v1491
        %v1676 = vpack.c.b16 %v1496, %v1494
        %v1677 = vpack.c.b16 %v1497, %v1495
        %v1678 = vpack.c.b16 %v1500, %v1498
        %v1679 = vpack.c.b16 %v1501, %v1499
        %v1680 = vpack.c.b16 %v1504, %v1502
        %v1681 = vpack.c.b16 %v1505, %v1503
        %v1682 = vpack.c.b16 %v1508, %v1506
        %v1683 = vpack.c.b16 %v1509, %v1507
        %v1684 = vpack.c.b16 %v1512, %v1510
        %v1685 = vpack.c.b16 %v1513, %v1511
        %v1686 = vpack.c.b16 %v1516, %v1514
        %v1687 = vpack.c.b16 %v1517, %v1515
        %v1688 = vpack.c.b16 %v1520, %v1518
        %v1689 = vpack.c.b16 %v1521, %v1519
        %v1690 = vpack.c.b16 %v1524, %v1522
        %v1691 = vpack.c.b16 %v1525, %v1523
        %v1692 = vpack.c.b16 %v1528, %v1526
        %v1693 = vpack.c.b16 %v1529, %v1527
        %v1694 = vpack.c.b16 %v1532, %v1530
        %v1695 = vpack.c.b16 %v1533, %v1531
        %v1696 = vpack.c.b16 %v1536, %v1534
        %v1697 = vpack.c.b16 %v1537, %v1535
        %v1698 = vpack.c.b16 %v1540, %v1538
        %v1699 = vpack.c.b16 %v1541, %v1539
        %v1700 = vpack.c.b16 %v1544, %v1542
        %v1701 = vpack.c.b16 %v1545, %v1543
        %v1702 = vpack.c.b16 %v1548, %v1546
        %v1703 = vpack.c.b16 %v1549, %v1547
        %v1704 = vpack.c.b16 %v1552, %v1550
        %v1705 = vpack.c.b16 %v1553, %v1551
        %v1706 = vpack.c.b16 %v1556, %v1554
        %v1707 = vpack.c.b16 %v1557, %v1555
        %v1708 = vpack.c.b16 %v1560, %v1558
        %v1709 = vpack.c.b16 %v1561, %v1559
        %v1710 = vpack.c.b16 %v1564, %v1562
        %v1711 = vpack.c.b16 %v1565, %v1563
        %v1712 = vpack.c.b16 %v1568, %v1566
        %v1713 = vpack.c.b16 %v1569, %v1567
        %v1714 = vpack.c.b16 %v1572, %v1570
        %v1715 = vpack.c.b16 %v1573, %v1571
        %v1716 = vpack.c.b16 %v1576, %v1574
        %v1717 = vpack.c.b16 %v1577, %v1575
        %v1718 = vpack.c.b16 %v1580, %v1578
        %v1719 = vpack.c.b16 %v1581, %v1579
        %v1720 = vpack.c.b16 %v1584, %v1582
        %v1721 = vpack.c.b16 %v1585, %v1583
        %v1722 = vpack.c.b16 %v1588, %v1586
        %v1723 = vpack.c.b16 %v1589, %v1587
        %v1724 = vpack.c.b16 %v1592, %v1590
        %v1725 = vpack.c.b16 %v1593, %v1591
        %v1726 = vpack.c.b16 %v1596, %v1594
        %v1727 = vpack.c.b16 %v1597, %v1595
        %v1728 = vpack.c.b16 %v1600, %v1598
        %v1729 = vpack.c.b16 %v1601, %v1599
        %1858 = vmatprep.subr.bf16.mxu0 %v1603
        %1859 = vmatpush1.bf16.msra.mxu0 %v1602
        %1860 = vmatprep.subr.bf16.mxu0 %v1605
        %1861 = vmatpush1.bf16.msra.mxu0 %v1604
        %1862 = vmatprep.subr.bf16.mxu0 %v1607
        %1863 = vmatpush1.bf16.msra.mxu0 %v1606
        %1864 = vmatprep.subr.bf16.mxu0 %v1609
        %1865 = vmatpush1.bf16.msra.mxu0 %v1608
        %1866 = vmatprep.subr.bf16.mxu0 %v1611
        %1867 = vmatpush1.bf16.msra.mxu0 %v1610
        %1868 = vmatprep.subr.bf16.mxu0 %v1613
        %1869 = vmatpush1.bf16.msra.mxu0 %v1612
        %1870 = vmatprep.subr.bf16.mxu0 %v1615
        %1871 = vmatpush1.bf16.msra.mxu0 %v1614
        %1872 = vmatprep.subr.bf16.mxu0 %v1617
        %1873 = vmatpush1.bf16.msra.mxu0 %v1616
        %1874 = vmatprep.subr.bf16.mxu0 %v1619
        %1875 = vmatpush1.bf16.msra.mxu0 %v1618
        %1876 = vmatprep.subr.bf16.mxu0 %v1621
        %1877 = vmatpush1.bf16.msra.mxu0 %v1620
        %1878 = vmatprep.subr.bf16.mxu0 %v1623
        %1879 = vmatpush1.bf16.msra.mxu0 %v1622
        %1880 = vmatprep.subr.bf16.mxu0 %v1625
        %1881 = vmatpush1.bf16.msra.mxu0 %v1624
        %1882 = vmatprep.subr.bf16.mxu0 %v1627
        %1883 = vmatpush1.bf16.msra.mxu0 %v1626
        %1884 = vmatprep.subr.bf16.mxu0 %v1629
        %1885 = vmatpush1.bf16.msra.mxu0 %v1628
        %1886 = vmatprep.subr.bf16.mxu0 %v1631
        %1887 = vmatpush1.bf16.msra.mxu0 %v1630
        %1888 = vmatprep.subr.bf16.mxu0 %v1633
        %1889 = vmatpush1.bf16.msra.mxu0 %v1632
        %1890 = vmatprep.mubr.bf16.mxu0 %v1071
        %1891 = vmatmul.mubr.bf16.gmra.mrb[0].mxu0 %v1070
        %v1892 = vpop.f32.mrb[0].mxu0
        %v1893 = vadd.f32 %v1211, %v1892
        %v1894 = vpop.f32.mrb[0].mxu0
        %v1895 = vadd.f32 %v1215, %v1894
        %v1896 = vpop.f32.mrb[0].mxu0
        %v1897 = vadd.f32 %v1211, %v1896
        %v1898 = vpop.f32.mrb[0].mxu0
        %v1899 = vadd.f32 %v1215, %v1898
        %1900 = vdwg.mxu0
        %1901 = vmatprep.subr.bf16.mxu0 %v1635
        %1902 = vmatpush1.bf16.msra.mxu0 %v1634
        %1903 = vmatprep.subr.bf16.mxu0 %v1637
        %1904 = vmatpush1.bf16.msra.mxu0 %v1636
        %1905 = vmatprep.subr.bf16.mxu0 %v1639
        %1906 = vmatpush1.bf16.msra.mxu0 %v1638
        %1907 = vmatprep.subr.bf16.mxu0 %v1641
        %1908 = vmatpush1.bf16.msra.mxu0 %v1640
        %1909 = vmatprep.subr.bf16.mxu0 %v1643
        %1910 = vmatpush1.bf16.msra.mxu0 %v1642
        %1911 = vmatprep.subr.bf16.mxu0 %v1645
        %1912 = vmatpush1.bf16.msra.mxu0 %v1644
        %1913 = vmatprep.subr.bf16.mxu0 %v1647
        %1914 = vmatpush1.bf16.msra.mxu0 %v1646
        %1915 = vmatprep.subr.bf16.mxu0 %v1649
        %1916 = vmatpush1.bf16.msra.mxu0 %v1648
        %1917 = vmatprep.subr.bf16.mxu0 %v1651
        %1918 = vmatpush1.bf16.msra.mxu0 %v1650
        %1919 = vmatprep.subr.bf16.mxu0 %v1653
        %1920 = vmatpush1.bf16.msra.mxu0 %v1652
        %1921 = vmatprep.subr.bf16.mxu0 %v1655
        %1922 = vmatpush1.bf16.msra.mxu0 %v1654
        %1923 = vmatprep.subr.bf16.mxu0 %v1657
        %1924 = vmatpush1.bf16.msra.mxu0 %v1656
        %1925 = vmatprep.subr.bf16.mxu0 %v1659
        %1926 = vmatpush1.bf16.msra.mxu0 %v1658
        %1927 = vmatprep.subr.bf16.mxu0 %v1661
        %1928 = vmatpush1.bf16.msra.mxu0 %v1660
        %1929 = vmatprep.subr.bf16.mxu0 %v1663
        %1930 = vmatpush1.bf16.msra.mxu0 %v1662
        %1931 = vmatprep.subr.bf16.mxu0 %v1665
        %1932 = vmatpush1.bf16.msra.mxu0 %v1664
        %1933 = vmatprep.mubr.bf16.mxu0 %v1073
        %1934 = vmatmul.mubr.bf16.gmra.mrb[0].mxu0 %v1072
        %v1935 = vpop.f32.mrb[0].mxu0
        %v1936 = vadd.f32 %v1893, %v1935
        %v1937 = vpop.f32.mrb[0].mxu0
        %v1938 = vadd.f32 %v1895, %v1937
        %v1939 = vpop.f32.mrb[0].mxu0
        %v1940 = vadd.f32 %v1897, %v1939
        %v1941 = vpop.f32.mrb[0].mxu0
        %v1942 = vadd.f32 %v1899, %v1941
        %1943 = vdwg.mxu0
        %1944 = vmatprep.subr.bf16.mxu0 %v1667
        %1945 = vmatpush1.bf16.msra.mxu0 %v1666
        %1946 = vmatprep.subr.bf16.mxu0 %v1669
        %1947 = vmatpush1.bf16.msra.mxu0 %v1668
        %1948 = vmatprep.subr.bf16.mxu0 %v1671
        %1949 = vmatpush1.bf16.msra.mxu0 %v1670
        %1950 = vmatprep.subr.bf16.mxu0 %v1673
        %1951 = vmatpush1.bf16.msra.mxu0 %v1672
        %1952 = vmatprep.subr.bf16.mxu0 %v1675
        %1953 = vmatpush1.bf16.msra.mxu0 %v1674
        %1954 = vmatprep.subr.bf16.mxu0 %v1677
        %1955 = vmatpush1.bf16.msra.mxu0 %v1676
        %1956 = vmatprep.subr.bf16.mxu0 %v1679
        %1957 = vmatpush1.bf16.msra.mxu0 %v1678
        %1958 = vmatprep.subr.bf16.mxu0 %v1681
        %1959 = vmatpush1.bf16.msra.mxu0 %v1680
        %1960 = vmatprep.subr.bf16.mxu0 %v1683
        %1961 = vmatpush1.bf16.msra.mxu0 %v1682
        %1962 = vmatprep.subr.bf16.mxu0 %v1685
        %1963 = vmatpush1.bf16.msra.mxu0 %v1684
        %1964 = vmatprep.subr.bf16.mxu0 %v1687
        %1965 = vmatpush1.bf16.msra.mxu0 %v1686
        %1966 = vmatprep.subr.bf16.mxu0 %v1689
        %1967 = vmatpush1.bf16.msra.mxu0 %v1688
        %1968 = vmatprep.subr.bf16.mxu0 %v1691
        %1969 = vmatpush1.bf16.msra.mxu0 %v1690
        %1970 = vmatprep.subr.bf16.mxu0 %v1693
        %1971 = vmatpush1.bf16.msra.mxu0 %v1692
        %1972 = vmatprep.subr.bf16.mxu0 %v1695
        %1973 = vmatpush1.bf16.msra.mxu0 %v1694
        %1974 = vmatprep.subr.bf16.mxu0 %v1697
        %1975 = vmatpush1.bf16.msra.mxu0 %v1696
        %1976 = vmatprep.mubr.bf16.mxu0 %v1075
        %1977 = vmatmul.mubr.bf16.gmra.mrb[0].mxu0 %v1074
        %v1978 = vpop.f32.mrb[0].mxu0
        %v1979 = vadd.f32 %v1936, %v1978
        %v1980 = vpop.f32.mrb[0].mxu0
        %v1981 = vadd.f32 %v1938, %v1980
        %v1982 = vpop.f32.mrb[0].mxu0
        %v1983 = vadd.f32 %v1940, %v1982
        %v1984 = vpop.f32.mrb[0].mxu0
        %v1985 = vadd.f32 %v1942, %v1984
        %1986 = vdwg.mxu0
        %1987 = vmatprep.subr.bf16.mxu0 %v1699
        %1988 = vmatpush1.bf16.msra.mxu0 %v1698
        %1989 = vmatprep.subr.bf16.mxu0 %v1701
        %1990 = vmatpush1.bf16.msra.mxu0 %v1700
        %1991 = vmatprep.subr.bf16.mxu0 %v1703
        %1992 = vmatpush1.bf16.msra.mxu0 %v1702
        %1993 = vmatprep.subr.bf16.mxu0 %v1705
        %1994 = vmatpush1.bf16.msra.mxu0 %v1704
        %1995 = vmatprep.subr.bf16.mxu0 %v1707
        %1996 = vmatpush1.bf16.msra.mxu0 %v1706
        %1997 = vmatprep.subr.bf16.mxu0 %v1709
        %1998 = vmatpush1.bf16.msra.mxu0 %v1708
        %1999 = vmatprep.subr.bf16.mxu0 %v1711
        %2000 = vmatpush1.bf16.msra.mxu0 %v1710
        %2001 = vmatprep.subr.bf16.mxu0 %v1713
        %2002 = vmatpush1.bf16.msra.mxu0 %v1712
        %2003 = vmatprep.subr.bf16.mxu0 %v1715
        %2004 = vmatpush1.bf16.msra.mxu0 %v1714
        %2005 = vmatprep.subr.bf16.mxu0 %v1717
        %2006 = vmatpush1.bf16.msra.mxu0 %v1716
        %2007 = vmatprep.subr.bf16.mxu0 %v1719
        %2008 = vmatpush1.bf16.msra.mxu0 %v1718
        %2009 = vmatprep.subr.bf16.mxu0 %v1721
        %2010 = vmatpush1.bf16.msra.mxu0 %v1720
        %2011 = vmatprep.subr.bf16.mxu0 %v1723
        %2012 = vmatpush1.bf16.msra.mxu0 %v1722
        %2013 = vmatprep.subr.bf16.mxu0 %v1725
        %2014 = vmatpush1.bf16.msra.mxu0 %v1724
        %2015 = vmatprep.subr.bf16.mxu0 %v1727
        %2016 = vmatpush1.bf16.msra.mxu0 %v1726
        %2017 = vmatprep.subr.bf16.mxu0 %v1729
        %2018 = vmatpush1.bf16.msra.mxu0 %v1728
        %2019 = vmatprep.mubr.bf16.mxu0 %v1077
        %2020 = vmatmul.mubr.bf16.gmra.mrb[0].mxu0 %v1076
        %v2021 = vpop.f32.mrb[0].mxu0
        %v2022 = vadd.f32 %v1979, %v2021
        %v2023 = vpop.f32.mrb[0].mxu0
        %v2024 = vadd.f32 %v1981, %v2023
        %v2025 = vpop.f32.mrb[0].mxu0
        %v2026 = vadd.f32 %v1983, %v2025
        %v2027 = vpop.f32.mrb[0].mxu0
        %v2028 = vadd.f32 %v1985, %v2027
        %2029 = vdwg.mxu0
        %v2030 = vmax.f32 %v2022, 0.0
        %v2031 = vmax.f32 %v2024, 0.0
        %v2032 = vmax.f32 %v2026, 0.0
        %v2033 = vmax.f32 %v2028, 0.0
        %v2034 = vld [vmem:[#allocation2] sm:$0x3]
        %v2035 = vmax.f32 %v2030, %v2032
        %v2036 = vrot.slane %v2035, 4
        %v2037 = vmax.f32 %v2035, %v2036
        %v2038 = vrot.slane %v2037, 2
        %v2039 = vmax.f32 %v2037, %v2038
        %v2040 = vrot.slane %v2039, 1
        %v2041 = vmax.f32 %v2039, %v2040
        %v2042 = vmax.f32 %v2031, %v2033
        %v2043 = vrot.slane %v2042, 4
        %v2044 = vmax.f32 %v2042, %v2043
        %v2045 = vrot.slane %v2044, 2
        %v2046 = vmax.f32 %v2044, %v2045
        %v2047 = vrot.slane %v2046, 1
        %v2048 = vmax.f32 %v2046, %v2047
        %v2051 = vcombine.low %v2041, %v2048
        %v2053 = vunpack.c.l.s4 1966171168
        %v2054 = vunpack.c.0.s8 %v2053
        %v2055 = vlaneseq
        %v2056 = vshrl.u32 %v2055, 7
        %v2057 = vsub.s32 %v2054, %v2056
        %v2058 = vrot.slane %v2051, %v2057
        %v2060 = vunpack.c.l.s4 1966171168
        %v2061 = vunpack.c.0.s8 %v2060
        %v2062 = vlaneseq
        %v2063 = vshrl.u32 %v2062, 7
        %v2064 = vsub.s32 %v2061, %v2063
        %v2065 = vrot.slane %v2058, %v2064
        %v2067 = vmax.f32 %v2034, %v2065
        %v2068 = vlaneseq
        %vm2069 = vcmp.ge.s32.totalorder %v2068, 0
        %vm2070 = vcmp.lt.s32.totalorder %v2068, 256
        %vm2071 = vmand %vm2069, %vm2070
        %2072 = vst.msk [vmem:[#allocation2] sm:$0x3] %vm2071, %v2067
        // Predicated region
        $region85: #{tpu_custom_call.1} parent=55 // pred_check
          %p2073 = pneg %p439
        $region86: #{tpu_custom_call.1} parent=55 // pred_check_branch
          %2075 = sbr.rel (%p2073) target = $region88
        $region87: #{tpu_custom_call.1} parent=55 // pred_region
          %v2076 = vld [vmem:[#allocation2] sm:$0x3]
          %v2078 = vlaneseq
          %v2079 = vshrl.u32 %v2078, 7
          %v2080 = vsub.s32 0, %v2079
          %v2081 = vrot.slane %v2076, %v2080
          %v2082 = vlaneseq
          %v2083 = vshrl.u32 %v2082, 7
          %v2084 = vsub.s32 1, %v2083
          %v2085 = vrot.slane %v2076, %v2084
          %v2088 = vpack.c.bf16 %v2081, %v2081
          %v2089 = vpack.c.bf16 %v2085, %v2085
          %v2090 = vld [vmem:[#allocation11] sm:$0xff]
          %v2091 = vld [vmem:[#allocation11 + $0x8] sm:$0xff]
          %v2092 = vld [vmem:[#allocation11 + $0x10] sm:$0xff]
          %v2093 = vld [vmem:[#allocation11 + $0x18] sm:$0xff]
          %v2094 = vld [vmem:[#allocation11 + $0x20] sm:$0xff]
          %v2095 = vld [vmem:[#allocation11 + $0x28] sm:$0xff]
          %v2096 = vld [vmem:[#allocation11 + $0x30] sm:$0xff]
          %v2097 = vld [vmem:[#allocation11 + $0x38] sm:$0xff]
          %v2098 = vld [vmem:[#allocation11 + $0x40] sm:$0xff]
          %v2099 = vld [vmem:[#allocation11 + $0x48] sm:$0xff]
          %v2100 = vld [vmem:[#allocation11 + $0x50] sm:$0xff]
          %v2101 = vld [vmem:[#allocation11 + $0x58] sm:$0xff]
          %v2102 = vld [vmem:[#allocation11 + $0x60] sm:$0xff]
          %v2103 = vld [vmem:[#allocation11 + $0x68] sm:$0xff]
          %v2104 = vld [vmem:[#allocation11 + $0x70] sm:$0xff]
          %v2105 = vld [vmem:[#allocation11 + $0x78] sm:$0xff]
          %v2106 = vld [vmem:[#allocation11 + $0x80] sm:$0xff]
          %v2107 = vld [vmem:[#allocation11 + $0x88] sm:$0xff]
          %v2108 = vld [vmem:[#allocation11 + $0x90] sm:$0xff]
          %v2109 = vld [vmem:[#allocation11 + $0x98] sm:$0xff]
          %v2110 = vld [vmem:[#allocation11 + $0xa0] sm:$0xff]
          %v2111 = vld [vmem:[#allocation11 + $0xa8] sm:$0xff]
          %v2112 = vld [vmem:[#allocation11 + $0xb0] sm:$0xff]
          %v2113 = vld [vmem:[#allocation11 + $0xb8] sm:$0xff]
          %v2114 = vld [vmem:[#allocation11 + $0xc0] sm:$0xff]
          %v2115 = vld [vmem:[#allocation11 + $0xc8] sm:$0xff]
          %v2116 = vld [vmem:[#allocation11 + $0xd0] sm:$0xff]
          %v2117 = vld [vmem:[#allocation11 + $0xd8] sm:$0xff]
          %v2118 = vld [vmem:[#allocation11 + $0xe0] sm:$0xff]
          %v2119 = vld [vmem:[#allocation11 + $0xe8] sm:$0xff]
          %v2120 = vld [vmem:[#allocation11 + $0xf0] sm:$0xff]
          %v2121 = vld [vmem:[#allocation11 + $0xf8] sm:$0xff]
          %v2122 = vld [vmem:[%s6] sm:$0x3]
          %v2155 = vunpack.c.l.b16 %v2090
          %v2156 = vunpack.c.h.b16 %v2090
          %v2157 = vunpack.c.l.b16 %v2091
          %v2158 = vunpack.c.h.b16 %v2091
          %v2159 = vunpack.c.l.b16 %v2092
          %v2160 = vunpack.c.h.b16 %v2092
          %v2161 = vunpack.c.l.b16 %v2093
          %v2162 = vunpack.c.h.b16 %v2093
          %v2163 = vunpack.c.l.b16 %v2094
          %v2164 = vunpack.c.h.b16 %v2094
          %v2165 = vunpack.c.l.b16 %v2095
          %v2166 = vunpack.c.h.b16 %v2095
          %v2167 = vunpack.c.l.b16 %v2096
          %v2168 = vunpack.c.h.b16 %v2096
          %v2169 = vunpack.c.l.b16 %v2097
          %v2170 = vunpack.c.h.b16 %v2097
          %v2171 = vunpack.c.l.b16 %v2098
          %v2172 = vunpack.c.h.b16 %v2098
          %v2173 = vunpack.c.l.b16 %v2099
          %v2174 = vunpack.c.h.b16 %v2099
          %v2175 = vunpack.c.l.b16 %v2100
          %v2176 = vunpack.c.h.b16 %v2100
          %v2177 = vunpack.c.l.b16 %v2101
          %v2178 = vunpack.c.h.b16 %v2101
          %v2179 = vunpack.c.l.b16 %v2102
          %v2180 = vunpack.c.h.b16 %v2102
          %v2181 = vunpack.c.l.b16 %v2103
          %v2182 = vunpack.c.h.b16 %v2103
          %v2183 = vunpack.c.l.b16 %v2104
          %v2184 = vunpack.c.h.b16 %v2104
          %v2185 = vunpack.c.l.b16 %v2105
          %v2186 = vunpack.c.h.b16 %v2105
          %v2187 = vunpack.c.l.b16 %v2106
          %v2188 = vunpack.c.h.b16 %v2106
          %v2189 = vunpack.c.l.b16 %v2107
          %v2190 = vunpack.c.h.b16 %v2107
          %v2191 = vunpack.c.l.b16 %v2108
          %v2192 = vunpack.c.h.b16 %v2108
          %v2193 = vunpack.c.l.b16 %v2109
          %v2194 = vunpack.c.h.b16 %v2109
          %v2195 = vunpack.c.l.b16 %v2110
          %v2196 = vunpack.c.h.b16 %v2110
          %v2197 = vunpack.c.l.b16 %v2111
          %v2198 = vunpack.c.h.b16 %v2111
          %v2199 = vunpack.c.l.b16 %v2112
          %v2200 = vunpack.c.h.b16 %v2112
          %v2201 = vunpack.c.l.b16 %v2113
          %v2202 = vunpack.c.h.b16 %v2113
          %v2203 = vunpack.c.l.b16 %v2114
          %v2204 = vunpack.c.h.b16 %v2114
          %v2205 = vunpack.c.l.b16 %v2115
          %v2206 = vunpack.c.h.b16 %v2115
          %v2207 = vunpack.c.l.b16 %v2116
          %v2208 = vunpack.c.h.b16 %v2116
          %v2209 = vunpack.c.l.b16 %v2117
          %v2210 = vunpack.c.h.b16 %v2117
          %v2211 = vunpack.c.l.b16 %v2118
          %v2212 = vunpack.c.h.b16 %v2118
          %v2213 = vunpack.c.l.b16 %v2119
          %v2214 = vunpack.c.h.b16 %v2119
          %v2215 = vunpack.c.l.b16 %v2120
          %v2216 = vunpack.c.h.b16 %v2120
          %v2217 = vunpack.c.l.b16 %v2121
          %v2218 = vunpack.c.h.b16 %v2121
          %v2219 = vpack.c.b16 %v2157, %v2155
          %v2220 = vpack.c.b16 %v2158, %v2156
          %v2221 = vpack.c.b16 %v2161, %v2159
          %v2222 = vpack.c.b16 %v2162, %v2160
          %v2223 = vpack.c.b16 %v2165, %v2163
          %v2224 = vpack.c.b16 %v2166, %v2164
          %v2225 = vpack.c.b16 %v2169, %v2167
          %v2226 = vpack.c.b16 %v2170, %v2168
          %v2227 = vpack.c.b16 %v2173, %v2171
          %v2228 = vpack.c.b16 %v2174, %v2172
          %v2229 = vpack.c.b16 %v2177, %v2175
          %v2230 = vpack.c.b16 %v2178, %v2176
          %v2231 = vpack.c.b16 %v2181, %v2179
          %v2232 = vpack.c.b16 %v2182, %v2180
          %v2233 = vpack.c.b16 %v2185, %v2183
          %v2234 = vpack.c.b16 %v2186, %v2184
          %v2235 = vpack.c.b16 %v2189, %v2187
          %v2236 = vpack.c.b16 %v2190, %v2188
          %v2237 = vpack.c.b16 %v2193, %v2191
          %v2238 = vpack.c.b16 %v2194, %v2192
          %v2239 = vpack.c.b16 %v2197, %v2195
          %v2240 = vpack.c.b16 %v2198, %v2196
          %v2241 = vpack.c.b16 %v2201, %v2199
          %v2242 = vpack.c.b16 %v2202, %v2200
          %v2243 = vpack.c.b16 %v2205, %v2203
          %v2244 = vpack.c.b16 %v2206, %v2204
          %v2245 = vpack.c.b16 %v2209, %v2207
          %v2246 = vpack.c.b16 %v2210, %v2208
          %v2247 = vpack.c.b16 %v2213, %v2211
          %v2248 = vpack.c.b16 %v2214, %v2212
          %v2249 = vpack.c.b16 %v2217, %v2215
          %v2250 = vpack.c.b16 %v2218, %v2216
          %v2284 = vlaneseq
          %v2285 = vshrl.u32 %v2284, 7
          %v2286 = vsub.s32 0, %v2285
          %v2287 = vrot.slane %v2122, %v2286
          %v2288 = vlaneseq
          %v2289 = vshrl.u32 %v2288, 7
          %v2290 = vsub.s32 1, %v2289
          %v2291 = vrot.slane %v2122, %v2290
          %2294 = vmatprep.subr.bf16.mxu0 %v2220
          %2295 = vmatpush1.bf16.msra.mxu0 %v2219
          %2296 = vmatprep.subr.bf16.mxu0 %v2222
          %2297 = vmatpush1.bf16.msra.mxu0 %v2221
          %2298 = vmatprep.subr.bf16.mxu0 %v2224
          %2299 = vmatpush1.bf16.msra.mxu0 %v2223
          %2300 = vmatprep.subr.bf16.mxu0 %v2226
          %2301 = vmatpush1.bf16.msra.mxu0 %v2225
          %2302 = vmatprep.subr.bf16.mxu0 %v2228
          %2303 = vmatpush1.bf16.msra.mxu0 %v2227
          %2304 = vmatprep.subr.bf16.mxu0 %v2230
          %2305 = vmatpush1.bf16.msra.mxu0 %v2229
          %2306 = vmatprep.subr.bf16.mxu0 %v2232
          %2307 = vmatpush1.bf16.msra.mxu0 %v2231
          %2308 = vmatprep.subr.bf16.mxu0 %v2234
          %2309 = vmatpush1.bf16.msra.mxu0 %v2233
          %2310 = vmatprep.subr.bf16.mxu0 %v2236
          %2311 = vmatpush1.bf16.msra.mxu0 %v2235
          %2312 = vmatprep.subr.bf16.mxu0 %v2238
          %2313 = vmatpush1.bf16.msra.mxu0 %v2237
          %2314 = vmatprep.subr.bf16.mxu0 %v2240
          %2315 = vmatpush1.bf16.msra.mxu0 %v2239
          %2316 = vmatprep.subr.bf16.mxu0 %v2242
          %2317 = vmatpush1.bf16.msra.mxu0 %v2241
          %2318 = vmatprep.subr.bf16.mxu0 %v2244
          %2319 = vmatpush1.bf16.msra.mxu0 %v2243
          %2320 = vmatprep.subr.bf16.mxu0 %v2246
          %2321 = vmatpush1.bf16.msra.mxu0 %v2245
          %2322 = vmatprep.subr.bf16.mxu0 %v2248
          %2323 = vmatpush1.bf16.msra.mxu0 %v2247
          %2324 = vmatprep.subr.bf16.mxu0 %v2250
          %2325 = vmatpush1.bf16.msra.mxu0 %v2249
          %2326 = vmatprep.mubr.bf16.mxu0 %v2089
          %2327 = vmatmul.mubr.bf16.gmra.mrb[0].mxu0 %v2088
          %v2328 = vpop.f32.mrb[0].mxu0
          %v2329 = vadd.f32 %v2287, %v2328
          %v2330 = vpop.f32.mrb[0].mxu0
          %v2331 = vadd.f32 %v2291, %v2330
          %v2332 = vpop.f32.mrb[0].mxu0
          %v2333 = vpop.f32.mrb[0].mxu0
          %2334 = vdwg.mxu0
          %v2335 = vmax.f32 %v2329, 0.0
          %v2336 = vmax.f32 %v2331, 0.0
          %v2337 = vld [vmem:[#allocation12] sm:$0xff]
          %v2338 = vld [vmem:[#allocation12 + $0x8] sm:$0xff]
          %v2339 = vld [vmem:[#allocation12 + $0x10] sm:$0xff]
          %v2340 = vld [vmem:[#allocation12 + $0x18] sm:$0xff]
          %v2341 = vld [vmem:[#allocation12 + $0x20] sm:$0xff]
          %v2342 = vld [vmem:[#allocation12 + $0x28] sm:$0xff]
          %v2343 = vld [vmem:[#allocation12 + $0x30] sm:$0xff]
          %v2344 = vld [vmem:[#allocation12 + $0x38] sm:$0xff]
          %v2345 = vld [vmem:[#allocation12 + $0x40] sm:$0xff]
          %v2346 = vld [vmem:[#allocation12 + $0x48] sm:$0xff]
          %v2347 = vld [vmem:[#allocation12 + $0x50] sm:$0xff]
          %v2348 = vld [vmem:[#allocation12 + $0x58] sm:$0xff]
          %v2349 = vld [vmem:[#allocation12 + $0x60] sm:$0xff]
          %v2350 = vld [vmem:[#allocation12 + $0x68] sm:$0xff]
          %v2351 = vld [vmem:[#allocation12 + $0x70] sm:$0xff]
          %v2352 = vld [vmem:[#allocation12 + $0x78] sm:$0xff]
          %v2353 = vld [vmem:[#allocation12 + $0x80] sm:$0xff]
          %v2354 = vld [vmem:[#allocation12 + $0x88] sm:$0xff]
          %v2355 = vld [vmem:[#allocation12 + $0x90] sm:$0xff]
          %v2356 = vld [vmem:[#allocation12 + $0x98] sm:$0xff]
          %v2357 = vld [vmem:[#allocation12 + $0xa0] sm:$0xff]
          %v2358 = vld [vmem:[#allocation12 + $0xa8] sm:$0xff]
          %v2359 = vld [vmem:[#allocation12 + $0xb0] sm:$0xff]
          %v2360 = vld [vmem:[#allocation12 + $0xb8] sm:$0xff]
          %v2361 = vld [vmem:[#allocation12 + $0xc0] sm:$0xff]
          %v2362 = vld [vmem:[#allocation12 + $0xc8] sm:$0xff]
          %v2363 = vld [vmem:[#allocation12 + $0xd0] sm:$0xff]
          %v2364 = vld [vmem:[#allocation12 + $0xd8] sm:$0xff]
          %v2365 = vld [vmem:[#allocation12 + $0xe0] sm:$0xff]
          %v2366 = vld [vmem:[#allocation12 + $0xe8] sm:$0xff]
          %v2367 = vld [vmem:[#allocation12 + $0xf0] sm:$0xff]
          %v2368 = vld [vmem:[#allocation12 + $0xf8] sm:$0xff]
          %v2369 = vld [vmem:[%s8] sm:$0x1]
          %2370 = vmatprep.subr.mxu0 0.0
          %2371 = vmatpush1.msra.mxu0 %v2337
          %2372 = vmatprep.subr.mxu0 0.0
          %2373 = vmatpush1.msra.mxu0 %v2338
          %2374 = vmatprep.subr.mxu0 0.0
          %2375 = vmatpush1.msra.mxu0 %v2339
          %2376 = vmatprep.subr.mxu0 0.0
          %2377 = vmatpush1.msra.mxu0 %v2340
          %2378 = vmatprep.subr.mxu0 0.0
          %2379 = vmatpush1.msra.mxu0 %v2341
          %2380 = vmatprep.subr.mxu0 0.0
          %2381 = vmatpush1.msra.mxu0 %v2342
          %2382 = vmatprep.subr.mxu0 0.0
          %2383 = vmatpush1.msra.mxu0 %v2343
          %2384 = vmatprep.subr.mxu0 0.0
          %2385 = vmatpush1.msra.mxu0 %v2344
          %2386 = vmatprep.subr.mxu0 0.0
          %2387 = vmatpush1.msra.mxu0 %v2345
          %2388 = vmatprep.subr.mxu0 0.0
          %2389 = vmatpush1.msra.mxu0 %v2346
          %2390 = vmatprep.subr.mxu0 0.0
          %2391 = vmatpush1.msra.mxu0 %v2347
          %2392 = vmatprep.subr.mxu0 0.0
          %2393 = vmatpush1.msra.mxu0 %v2348
          %2394 = vmatprep.subr.mxu0 0.0
          %2395 = vmatpush1.msra.mxu0 %v2349
          %2396 = vmatprep.subr.mxu0 0.0
          %2397 = vmatpush1.msra.mxu0 %v2350
          %2398 = vmatprep.subr.mxu0 0.0
          %2399 = vmatpush1.msra.mxu0 %v2351
          %2400 = vmatprep.subr.mxu0 0.0
          %2401 = vmatpush1.msra.mxu0 %v2352
          %2402 = vmatprep.subr.mxu0 0.0
          %2403 = vmatpush1.msra.mxu0 %v2353
          %2404 = vmatprep.subr.mxu0 0.0
          %2405 = vmatpush1.msra.mxu0 %v2354
          %2406 = vmatprep.subr.mxu0 0.0
          %2407 = vmatpush1.msra.mxu0 %v2355
          %2408 = vmatprep.subr.mxu0 0.0
          %2409 = vmatpush1.msra.mxu0 %v2356
          %2410 = vmatprep.subr.mxu0 0.0
          %2411 = vmatpush1.msra.mxu0 %v2357
          %2412 = vmatprep.subr.mxu0 0.0
          %2413 = vmatpush1.msra.mxu0 %v2358
          %2414 = vmatprep.subr.mxu0 0.0
          %2415 = vmatpush1.msra.mxu0 %v2359
          %2416 = vmatprep.subr.mxu0 0.0
          %2417 = vmatpush1.msra.mxu0 %v2360
          %2418 = vmatprep.subr.mxu0 0.0
          %2419 = vmatpush1.msra.mxu0 %v2361
          %2420 = vmatprep.subr.mxu0 0.0
          %2421 = vmatpush1.msra.mxu0 %v2362
          %2422 = vmatprep.subr.mxu0 0.0
          %2423 = vmatpush1.msra.mxu0 %v2363
          %2424 = vmatprep.subr.mxu0 0.0
          %2425 = vmatpush1.msra.mxu0 %v2364
          %2426 = vmatprep.subr.mxu0 0.0
          %2427 = vmatpush1.msra.mxu0 %v2365
          %2428 = vmatprep.subr.mxu0 0.0
          %2429 = vmatpush1.msra.mxu0 %v2366
          %2430 = vmatprep.subr.mxu0 0.0
          %2431 = vmatpush1.msra.mxu0 %v2367
          %2432 = vmatprep.subr.mxu0 0.0
          %2433 = vmatpush1.msra.mxu0 %v2368
          %2434 = vmatprep.mubr.f32.mxu0 %v2336
          %2435 = vmatmul.mubr.f32.gmra.mrb[0].mxu0 %v2335
          %v2436 = vpop.f32.mrb[0].mxu0
          %v2437 = vadd.f32 %v2369, %v2436
          %v2438 = vpop.f32.mrb[0].mxu0
          %2439 = vdwg.mxu0
          %2440 = vst [vmem:[%s436] sm:$0x1] %v2437
        $region88: #{tpu_custom_call.1} parent=55 // pred_fallthru
          _
        %s2441 = sand.u32 %s245, 1
        %s2442 = scalar_lea.sflag [#allocation5], %s2441
        %s2443 = sand.u32 %s245, 1
        %s2444 = scalar_lea.vmem [#allocation14], %s2443
        // Predicated region
        $region89: #{tpu_custom_call.1} parent=55 // pred_check
          %p2445 = pneg %p255
        $region90: #{tpu_custom_call.1} parent=55 // pred_check_branch
          %2447 = sbr.rel (%p2445) target = $region92
        $region91: #{tpu_custom_call.1} parent=55 // pred_region
          %s2449 = ssub.s32 16, 16
          %2450 = vsyncadd %s2442, %s2449
          %s2451 = smul.addr %s33, 16
          %s2452 = scalar_lea.hbm %s9, %s2451
          %s2454 = sshll.u32 %s2444, 4
          %s2455 = int_to_ptr.vmem [resolvable:$true] %s2454
          %2457 = dma.vmem_to_hbm [thread:$0]  %s2455, 16, %s2452, %s2442
        $region92: #{tpu_custom_call.1} parent=55 // pred_fallthru
          _
      $region56: #{tpu_custom_call.1} parent=5 // pred_fallthru
        _
      %p2458 = scmp.le.s32.totalorder 2, %s24
      // Predicated region
      $region93: #{tpu_custom_call.1} parent=5 // pred_check
        %p2459 = pneg %p2458
      $region94: #{tpu_custom_call.1} parent=5 // pred_check_branch
        %2461 = sbr.rel (%p2459) target = $region96
      $region95: #{tpu_custom_call.1} parent=5 // pred_region
        %s2462 = ssub.s32 %s24, 2
        // Predicated region
        $region97: #{tpu_custom_call.1} parent=95 // pred_check
          %p2463 = pneg %p261
        $region98: #{tpu_custom_call.1} parent=95 // pred_check_branch
          %2465 = sbr.rel (%p2463) target = $region100
        $region99: #{tpu_custom_call.1} parent=95 // pred_region
          %s2466 = sand.u32 %s246, 1
          %s2467 = scalar_lea.sflag [#allocation5], %s2466
          %s2468 = sand.u32 %s246, 1
          %s2469 = scalar_lea.vmem [#allocation14], %s2468
          %2470 = dma.done %s2467, 16
        $region100: #{tpu_custom_call.1} parent=95 // pred_fallthru
          _
      $region96: #{tpu_custom_call.1} parent=5 // pred_fallthru
        _
    $region6: #{tpu_custom_call.1} parent=1 // loop_footer
      %s28 = sadd.s32 1, %s24
    $region7: #{tpu_custom_call.1} parent=1 // loop_footer_branch
      %23 = sbr.rel target = $region3
    $region8: #{tpu_custom_call.1} parent=1 // loop_exit
      _
    %2471 = vsyncpa [#allocation4], 1
    %s2472 = scalar_lea.sflag [#allocation4], 1
    %2473 = vsyncpa %s2472, 1
    %2474 = vsyncpa [#allocation7], 1
    %2475 = vsyncpa [#allocation10], 1
    %2476 = vsyncpa [#allocation13], 1
    %2477 = vsyncpa [#allocation5], 1
    %s2478 = scalar_lea.sflag [#allocation5], 1
    %2479 = vsyncpa %s2478, 1

</llo_original>
